<compile_context>
chip_gen: v6e
topology: v6e:2x2x1
jax: 0.10.0
libtpu: 0.0.40
codegen_flags: <defaults>
</compile_context>

<pallas_src>
import numpy as np
import jax
import jax.numpy as jnp
from jax.experimental import pallas as pl
from jax.experimental.pallas import tpu as pltpu

HIDDEN = 32        # hidden_size
EMB = 16           # input_embedding_size
OUT_DIM = 2        # output_shape[-1]
GATE = 4 * HIDDEN  # 128 = LSTM gate width = padded GRU gate width = slab lanes
LANES = 128

# ---- weight-slab row offsets (8-aligned so every row slice is tile aligned) --
EMBW_R, EMBB_R = 0, 8                      # [2,16], [1,16]
LSTM_WI_R, LSTM_WH_R, LSTM_B_R = 16, 32, 64  # [16,128], [32,128], [1,128]
GRU_WI_R, GRU_WH_R = 72, 80                # [2,128], [32,128]
GRU_BI_R, GRU_BH_R = 112, 120              # [1,128], [1,128]
MLP_W1_R, MLP_B1_R = 128, 160              # [32,32], [1,32]
MLP_W2_R, MLP_B2_R = 168, 200              # [32,4],  [1,4]
SLAB_ROWS = 208


# ----------------------------- math helpers ----------------------------------
def _sigmoid(x):
    # single-EUP sigmoid: 0.5 * (tanh(x/2) + 1)
    return 0.5 * (jnp.tanh(0.5 * x) + 1.0)


def _softplus(x):
    return jnp.maximum(x, 0.0) + jnp.log1p(jnp.exp(-jnp.abs(x)))


def _leaky_relu(x, slope=0.01):
    return jnp.where(x >= 0, x, slope * x)


# ------------------------------ Pallas kernel ---------------------------------
def flownet_kernel(hist_ref, fut_ref, w_ref, out_ref):
    T_hist, B, F = hist_ref.shape          # B = batch tile (multiple of 8)
    T_fut = fut_ref.shape[0]
    H = HIDDEN

    # ---- weight views from the packed slab (static, tile-aligned slices) ----
    embW = w_ref[pl.ds(EMBW_R, OUT_DIM), :]        # [2, 128] (lanes 0:16 used)
    embb = w_ref[pl.ds(EMBB_R, 1), :]              # [1, 128]
    lstm_Wi = w_ref[pl.ds(LSTM_WI_R, EMB), :]      # [16, 128]
    lstm_Wh = w_ref[pl.ds(LSTM_WH_R, H), :]        # [32, 128]
    lstm_b = w_ref[pl.ds(LSTM_B_R, 1), :]          # [1, 128]  (bih + bhh)
    gru_Wi = w_ref[pl.ds(GRU_WI_R, OUT_DIM), :]    # [2, 128]  (3H padded to 128)
    gru_Wh = w_ref[pl.ds(GRU_WH_R, H), :]          # [32, 128]
    gru_bi = w_ref[pl.ds(GRU_BI_R, 1), :]          # [1, 128]  (bih + bhh[r,z])
    gru_bh = w_ref[pl.ds(GRU_BH_R, 1), :]          # [1, 128]  (bhh[n] only)
    W1 = w_ref[pl.ds(MLP_W1_R, H), :][:, 0:H]      # [32, 32]
    b1 = w_ref[pl.ds(MLP_B1_R, 1), :][:, 0:H]      # [1, 32]
    W2 = w_ref[pl.ds(MLP_W2_R, H), :][:, 0:2 * OUT_DIM]   # [32, 4]
    b2 = w_ref[pl.ds(MLP_B2_R, 1), :][:, 0:2 * OUT_DIM]   # [1, 4]

    # -------- hoisted, batched input projections (off the serial chain) ------
    # TODO(synk): ship hist/fut lane-dense ([2,T,B] batch-on-lanes) once B/T
    # grow; kept (T,TB,2) here to avoid an in-kernel relayout at tiny sizes.
    hist_flat = hist_ref[...].reshape(T_hist * B, F)                # [Th*B, 2]
    fut_flat = fut_ref[...].reshape(T_fut * B, F)                   # [Tf*B, 2]

    # history embedding: K=2 broadcast-FMA (no MXU pass), then one MXU matmul
    e_all = _leaky_relu(hist_flat[:, 0:1] * embW[0:1, 0:EMB]
                        + hist_flat[:, 1:2] * embW[1:2, 0:EMB]
                        + embb[:, 0:EMB])                           # [Th*B, 16]
    lstm_in = (jnp.dot(e_all, lstm_Wi,
                       preferred_element_type=jnp.float32)
               + lstm_b)                                            # [Th*B,128]

    # shifted y_{t-1} sequence: [hist[-1], fut[0], ..., fut[T_fut-2]]
    yprev_flat = jnp.concatenate(
        [hist_flat[(T_hist - 1) * B:T_hist * B, :],
         fut_flat[:(T_fut - 1) * B, :]], axis=0)                    # [Tf*B, 2]
    gi_all = (yprev_flat[:, 0:1] * gru_Wi[0:1, :]
              + yprev_flat[:, 1:2] * gru_Wi[1:2, :]
              + gru_bi)                                             # [Tf*B,128]
    dy_all = fut_flat - yprev_flat                                  # [Tf*B, 2]

    # -------- history encoder: LSTM(16 -> 32), 1 masked EUP pass per step ----
    lane4h = jax.lax.broadcasted_iota(jnp.int32, (B, GATE), 1)
    is_cand = jnp.logical_and(lane4h >= 2 * H, lane4h < 3 * H)      # cell cand.
    pre = jnp.where(is_cand, 1.0, 0.5)        # tanh arg scale (hoisted const)

    h = jnp.zeros((B, H), jnp.float32)
    c = jnp.zeros((B, H), jnp.float32)
    # short static trip count -> unrolled (use lax.fori_loop if T grows >~16)
    for t in range(T_hist):
        g = lstm_in[t * B:(t + 1) * B, :] + jnp.dot(
            h, lstm_Wh, preferred_element_type=jnp.float32)         # [B, 128]
        tt = jnp.tanh(g * pre)                # single EUP pass over all lanes
        s = jnp.where(is_cand, tt, 0.5 * tt + 0.5)   # sigmoid(gates)/tanh(cand)
        i_g = s[:, 0:H]
        f_g = s[:, H:2 * H]
        g_g = s[:, 2 * H:3 * H]
        o_g = s[:, 3 * H:4 * H]
        c = f_g * c + i_g * g_g
        h = o_g * jnp.tanh(c)                 # dependent EUP pass (unavoidable)
    z = h                                                           # [B, 32]

    # -------- flow inverse: GRUCell(2 -> 32); head hoisted out of the loop ---
    zs = []
    for t in range(T_fut):
        gi = gi_all[t * B:(t + 1) * B, :]                           # [B, 128]
        gh = jnp.dot(z, gru_Wh,
                     preferred_element_type=jnp.float32) + gru_bh   # [B, 128]
        s = _sigmoid(gi[:, 0:2 * H] + gh[:, 0:2 * H])   # one EUP pass for r,u
        r = s[:, 0:H]
        u = s[:, H:2 * H]
        n = jnp.tanh(gi[:, 2 * H:3 * H] + r * gh[:, 2 * H:3 * H])
        z = (1.0 - u) * n + u * z
        zs.append(z)
    z_all = jnp.concatenate(zs, axis=0)                             # [Tf*B, 32]

    # batched MLP(32->32->4) head + vectorized flow math (off the chain)
    hm = jnp.maximum(
        jnp.dot(z_all, W1, preferred_element_type=jnp.float32) + b1, 0.0)
    ls = jnp.dot(hm, W2, preferred_element_type=jnp.float32) + b2   # [Tf*B, 4]
    dloc = ls[:, 0:OUT_DIM]
    scale = _softplus(ls[:, OUT_DIM:2 * OUT_DIM]) + 1e-3
    x = (dy_all - dloc) / scale                                     # [Tf*B, 2]
    xx = x * x
    lsc = jnp.log(scale)

    acc_sq = jnp.zeros((B, OUT_DIM), jnp.float32)
    acc_ls = jnp.zeros((B, OUT_DIM), jnp.float32)
    for t in range(T_fut):                    # tiny unrolled tree of adds
        acc_sq = acc_sq + xx[t * B:(t + 1) * B, :]
        acc_ls = acc_ls + lsc[t * B:(t + 1) * B, :]

    log2pi = float(np.log(2.0 * np.pi))
    D = float(T_fut * OUT_DIM)
    log_prob = (-0.5 * (acc_sq[:, 0:1] + acc_sq[:, 1:2])
                - 0.5 * D * log2pi)                                 # [B, 1]
    logabsdet = -(acc_ls[:, 0:1] + acc_ls[:, 1:2])                  # [B, 1]

    # merged, single store: lane 0 = log_prob, lane 1 = logabsdet
    lane = jax.lax.broadcasted_iota(jnp.int32, (B, 2), 1)
    out_ref[...] = jnp.where(lane == 0,
                             jnp.broadcast_to(log_prob, (B, 2)),
                             jnp.broadcast_to(logabsdet, (B, 2)))


# ------------------------------- wrapper --------------------------------------
def flownet_forward(history, future, w_slab, max_batch_block=128):
    """history: [B,T_hist,2], future: [B,T_fut,2] -> (log_prob[B], logabsdet[B])."""
    B, T_hist, _ = history.shape
    T_fut = future.shape[1]

    # Batch tile: multiple of 8 sublanes; on big batches ensure >= 2 grid
    # blocks so the "parallel" axis shards across both v7x TensorCores.
    B8 = 8 * ((B + 7) // 8)
    if B8 >= 16:
        TB = min(max_batch_block, 8 * ((B8 + 15) // 16))
    else:
        TB = 8
    B_pad = ((B + TB - 1) // TB) * TB

    hist_tb = jnp.transpose(history, (1, 0, 2)).astype(jnp.float32)
    fut_tb = jnp.transpose(future, (1, 0, 2)).astype(jnp.float32)
    if B_pad != B:
        pad = ((0, 0), (0, B_pad - B), (0, 0))
        hist_tb = jnp.pad(hist_tb, pad)
        fut_tb = jnp.pad(fut_tb, pad)

    grid = (B_pad // TB,)
    out = pl.pallas_call(
        flownet_kernel,
        out_shape=jax.ShapeDtypeStruct((B_pad, 2), jnp.float32),
        grid=grid,
        in_specs=[
            pl.BlockSpec((T_hist, TB, OUT_DIM), lambda b: (0, b, 0)),
            pl.BlockSpec((T_fut, TB, OUT_DIM), lambda b: (0, b, 0)),
            pl.BlockSpec((SLAB_ROWS, LANES), lambda b: (0, 0)),   # one weight slab
        ],
        out_specs=pl.BlockSpec((TB, 2), lambda b: (b, 0)),
        compiler_params=pltpu.CompilerParams(
            dimension_semantics=("parallel",),
            vmem_limit_bytes=32 * 1024 * 1024),   # explicit budget (v7x/v5e)
    )(hist_tb, fut_tb, w_slab)
    return out[:B, 0], out[:B, 1]


# -------------------------- deterministic params -------------------------------
def init_params(key):
    """PyTorch-style U(-1/sqrt(fan_in), 1/sqrt(fan_in)) init, torch layouts."""
    ks = jax.random.split(key, 14)

    def u(k, shape, fan_in):
        b = 1.0 / np.sqrt(fan_in)
        return jax.random.uniform(k, shape, jnp.float32, -b, b)

    H, E = HIDDEN, EMB
    return (
        u(ks[0], (E, OUT_DIM), OUT_DIM),      # embW      [16, 2]
        u(ks[1], (E,), OUT_DIM),              # embb      [16]
        u(ks[2], (4 * H, E), H),              # lstm_Wih  [128, 16]
        u(ks[3], (4 * H, H), H),              # lstm_Whh  [128, 32]
        u(ks[4], (4 * H,), H),                # lstm_bih
        u(ks[5], (4 * H,), H),                # lstm_bhh
        u(ks[6], (3 * H, OUT_DIM), H),        # gru_Wih   [96, 2]
        u(ks[7], (3 * H, H), H),              # gru_Whh   [96, 32]
        u(ks[8], (3 * H,), H),                # gru_bih
        u(ks[9], (3 * H,), H),                # gru_bhh
        u(ks[10], (H, H), H),                 # W1        [32, 32]
        u(ks[11], (H,), H),                   # b1
        u(ks[12], (2 * OUT_DIM, H), H),       # W2        [4, 32]
        u(ks[13], (2 * OUT_DIM,), H),         # b2
    )


def pack_params(params):
    """Pack all weights (transposed to [in,out], GRU padded to 128 lanes,
    biases fused/folded) into one [SLAB_ROWS, 128] f32 slab."""
    (embW, embb, lWih, lWhh, lbih, lbhh,
     gWih, gWhh, gbih, gbhh, W1, b1, W2, b2) = [np.asarray(p, np.float32)
                                                for p in params]
    H = HIDDEN
    slab = np.zeros((SLAB_ROWS, LANES), np.float32)

    def put(row, a):
        a = np.asarray(a, np.float32)
        if a.ndim == 1:
            a = a[None, :]
        slab[row:row + a.shape[0], :a.shape[1]] = a

    put(EMBW_R, embW.T)                       # [2, 16]
    put(EMBB_R, embb)                         # [1, 16]
    put(LSTM_WI_R, lWih.T)                    # [16, 128]
    put(LSTM_WH_R, lWhh.T)                    # [32, 128]
    put(LSTM_B_R, lbih + lbhh)                # [1, 128]

    gWi = np.zeros((OUT_DIM, LANES), np.float32)
    gWi[:, :3 * H] = gWih.T
    put(GRU_WI_R, gWi)                        # [2, 128]
    gWh = np.zeros((H, LANES), np.float32)
    gWh[:, :3 * H] = gWhh.T
    put(GRU_WH_R, gWh)                        # [32, 128]
    gbi = np.zeros((LANES,), np.float32)
    gbi[:3 * H] = gbih
    gbi[:2 * H] += gbhh[:2 * H]               # fold b_hr, b_hz into input bias
    put(GRU_BI_R, gbi)
    gbh = np.zeros((LANES,), np.float32)
    gbh[2 * H:3 * H] = gbhh[2 * H:3 * H]      # b_hn stays inside r*(.)
    put(GRU_BH_R, gbh)

    put(MLP_W1_R, W1.T)                       # [32, 32]
    put(MLP_B1_R, b1)                         # [1, 32]
    put(MLP_W2_R, W2.T)                       # [32, 4]
    put(MLP_B2_R, b2)                         # [1, 4]
    return jnp.asarray(slab)


# ----------------------------- pure-JAX reference ------------------------------
def flownet_reference(history, future, params):
    (embW, embb, lWih, lWhh, lbih, lbhh,
     gWih, gWhh, gbih, gbhh, W1, b1, W2, b2) = params
    B = history.shape[0]
    H = HIDDEN
    hist_tb = jnp.transpose(history, (1, 0, 2))
    fut_tb = jnp.transpose(future, (1, 0, 2))

    h = jnp.zeros((B, H), jnp.float32)
    c = jnp.zeros((B, H), jnp.float32)
    for t in range(hist_tb.shape[0]):
        e = jax.nn.leaky_relu(hist_tb[t] @ embW.T + embb)
        g = e @ lWih.T + h @ lWhh.T + lbih + lbhh
        i = jax.nn.sigmoid(g[:, :H])
        f = jax.nn.sigmoid(g[:, H:2 * H])
        gg = jnp.tanh(g[:, 2 * H:3 * H])
        o = jax.nn.sigmoid(g[:, 3 * H:])
        c = f * c + i * gg
        h = o * jnp.tanh(c)
    z = h

    y_tm1 = history[:, -1]
    sq = jnp.zeros((B,), jnp.float32)
    lad = jnp.zeros((B,), jnp.float32)
    for t in range(fut_tb.shape[0]):
        y_t = fut_tb[t]
        gi = y_tm1 @ gWih.T + gbih
        gh = z @ gWhh.T + gbhh
        r = jax.nn.sigmoid(gi[:, :H] + gh[:, :H])
        uu = jax.nn.sigmoid(gi[:, H:2 * H] + gh[:, H:2 * H])
        n = jnp.tanh(gi[:, 2 * H:] + r * gh[:, 2 * H:])
        z = (1 - uu) * n + uu * z
        hm = jnp.maximum(z @ W1.T + b1, 0.0)
        ls = hm @ W2.T + b2
        dloc = ls[:, :OUT_DIM]
        scale = jax.nn.softplus(ls[:, OUT_DIM:]) + 1e-3
        x_t = (y_t - (y_tm1 + dloc)) / scale
        sq = sq + jnp.sum(x_t * x_t, axis=-1)
        lad = lad + jnp.sum(-jnp.log(scale), axis=-1)
        y_tm1 = y_t
    D = fut_tb.shape[0] * OUT_DIM
    lp = -0.5 * sq - 0.5 * D * jnp.log(2.0 * jnp.pi)
    return lp, lad


# ---------------------------------- main ---------------------------------------
if __name__ == "__main__":
    key = jax.random.PRNGKey(0)
    k_hist, k_fut, k_par = jax.random.split(key, 3)

    B, T_HIST, FUTURE_LENS = 2, 8, 4
    history = jax.random.normal(k_hist, (B, T_HIST, OUT_DIM), jnp.float32)
    future = jax.random.normal(k_fut, (B, FUTURE_LENS, OUT_DIM), jnp.float32)
    params = init_params(k_par)
    w_slab = pack_params(params)

    log_prob, logabsdet = flownet_forward(history, future, w_slab)
    jax.block_until_ready((log_prob, logabsdet))

    lp_ref, lad_ref = flownet_reference(history, future, params)
    assert np.allclose(np.asarray(log_prob), np.asarray(lp_ref),
                       rtol=1e-3, atol=1e-3), (log_prob, lp_ref)
    assert np.allclose(np.asarray(logabsdet), np.asarray(lad_ref),
                       rtol=1e-3, atol=1e-3), (logabsdet, lad_ref)

    print("KERNEL_OK")
</pallas_src>

<mosaic_0001>
module attributes {stable_mosaic.version = 11 : i64} {
  func.func @flownet_kernel(%arg0: i32, %arg1: memref<8x8x2xf32, #tpu.memory_space<vmem>>, %arg2: memref<4x8x2xf32, #tpu.memory_space<vmem>>, %arg3: memref<208x128xf32, #tpu.memory_space<vmem>>, %arg4: memref<8x2xf32, #tpu.memory_space<vmem>>) attributes {dimension_semantics = [#tpu.dimension_semantics<parallel>], iteration_bounds = array<i64: 1>, scalar_prefetch = 0 : i64, scratch_operands = 0 : i64, tpu.core_type = #tpu.core_type<tc>, window_params = [{transform_indices = @transform_0, window_bounds = array<i64: 8, 8, 2>}, {transform_indices = @transform_1, window_bounds = array<i64: 4, 8, 2>}, {pipeline_mode = #tpu.pipeline_mode<synchronous>, transform_indices = @transform_2, window_bounds = array<i64: 208, 128>}, {transform_indices = @transform_3, window_bounds = array<i64: 8, 2>}]} {
    %c0 = arith.constant 0 : index
    %c0_0 = arith.constant 0 : index
    %0 = vector.load %arg3[%c0, %c0_0] : memref<208x128xf32, #tpu.memory_space<vmem>>, vector<2x128xf32>
    %c8 = arith.constant 8 : index
    %c0_1 = arith.constant 0 : index
    %1 = vector.load %arg3[%c8, %c0_1] : memref<208x128xf32, #tpu.memory_space<vmem>>, vector<1x128xf32>
    %c16 = arith.constant 16 : index
    %c0_2 = arith.constant 0 : index
    %2 = vector.load %arg3[%c16, %c0_2] : memref<208x128xf32, #tpu.memory_space<vmem>>, vector<16x128xf32>
    %c32 = arith.constant 32 : index
    %c0_3 = arith.constant 0 : index
    %3 = vector.load %arg3[%c32, %c0_3] : memref<208x128xf32, #tpu.memory_space<vmem>>, vector<32x128xf32>
    %c64 = arith.constant 64 : index
    %c0_4 = arith.constant 0 : index
    %4 = vector.load %arg3[%c64, %c0_4] : memref<208x128xf32, #tpu.memory_space<vmem>>, vector<1x128xf32>
    %c72 = arith.constant 72 : index
    %c0_5 = arith.constant 0 : index
    %5 = vector.load %arg3[%c72, %c0_5] : memref<208x128xf32, #tpu.memory_space<vmem>>, vector<2x128xf32>
    %c80 = arith.constant 80 : index
    %c0_6 = arith.constant 0 : index
    %6 = vector.load %arg3[%c80, %c0_6] : memref<208x128xf32, #tpu.memory_space<vmem>>, vector<32x128xf32>
    %c112 = arith.constant 112 : index
    %c0_7 = arith.constant 0 : index
    %7 = vector.load %arg3[%c112, %c0_7] : memref<208x128xf32, #tpu.memory_space<vmem>>, vector<1x128xf32>
    %c120 = arith.constant 120 : index
    %c0_8 = arith.constant 0 : index
    %8 = vector.load %arg3[%c120, %c0_8] : memref<208x128xf32, #tpu.memory_space<vmem>>, vector<1x128xf32>
    %c128 = arith.constant 128 : index
    %c0_9 = arith.constant 0 : index
    %9 = vector.load %arg3[%c128, %c0_9] : memref<208x128xf32, #tpu.memory_space<vmem>>, vector<32x128xf32>
    %10 = vector.extract_strided_slice %9 {offsets = [0, 0], sizes = [32, 32], strides = [1, 1]} : vector<32x128xf32> to vector<32x32xf32>
    %c160 = arith.constant 160 : index
    %c0_10 = arith.constant 0 : index
    %11 = vector.load %arg3[%c160, %c0_10] : memref<208x128xf32, #tpu.memory_space<vmem>>, vector<1x128xf32>
    %12 = vector.extract_strided_slice %11 {offsets = [0, 0], sizes = [1, 32], strides = [1, 1]} : vector<1x128xf32> to vector<1x32xf32>
    %c168 = arith.constant 168 : index
    %c0_11 = arith.constant 0 : index
    %13 = vector.load %arg3[%c168, %c0_11] : memref<208x128xf32, #tpu.memory_space<vmem>>, vector<32x128xf32>
    %14 = vector.extract_strided_slice %13 {offsets = [0, 0], sizes = [32, 4], strides = [1, 1]} : vector<32x128xf32> to vector<32x4xf32>
    %c200 = arith.constant 200 : index
    %c0_12 = arith.constant 0 : index
    %15 = vector.load %arg3[%c200, %c0_12] : memref<208x128xf32, #tpu.memory_space<vmem>>, vector<1x128xf32>
    %16 = vector.extract_strided_slice %15 {offsets = [0, 0], sizes = [1, 4], strides = [1, 1]} : vector<1x128xf32> to vector<1x4xf32>
    %c0_13 = arith.constant 0 : index
    %c0_14 = arith.constant 0 : index
    %c0_15 = arith.constant 0 : index
    %17 = vector.load %arg1[%c0_13, %c0_14, %c0_15] : memref<8x8x2xf32, #tpu.memory_space<vmem>>, vector<8x8x2xf32>
    %18 = vector.shape_cast %17 : vector<8x8x2xf32> to vector<64x2xf32>
    %c0_16 = arith.constant 0 : index
    %c0_17 = arith.constant 0 : index
    %c0_18 = arith.constant 0 : index
    %19 = vector.load %arg2[%c0_16, %c0_17, %c0_18] : memref<4x8x2xf32, #tpu.memory_space<vmem>>, vector<4x8x2xf32>
    %20 = vector.shape_cast %19 : vector<4x8x2xf32> to vector<32x2xf32>
    %21 = vector.extract_strided_slice %18 {offsets = [0, 0], sizes = [64, 1], strides = [1, 1]} : vector<64x2xf32> to vector<64x1xf32>
    %22 = vector.extract_strided_slice %0 {offsets = [0, 0], sizes = [1, 16], strides = [1, 1]} : vector<2x128xf32> to vector<1x16xf32>
    %23 = vector.broadcast %21 : vector<64x1xf32> to vector<64x16xf32>
    %24 = vector.broadcast %22 : vector<1x16xf32> to vector<64x16xf32>
    %25 = arith.mulf %23, %24 : vector<64x16xf32>
    %26 = vector.extract_strided_slice %18 {offsets = [0, 1], sizes = [64, 1], strides = [1, 1]} : vector<64x2xf32> to vector<64x1xf32>
    %27 = vector.extract_strided_slice %0 {offsets = [1, 0], sizes = [1, 16], strides = [1, 1]} : vector<2x128xf32> to vector<1x16xf32>
    %28 = vector.broadcast %26 : vector<64x1xf32> to vector<64x16xf32>
    %29 = vector.broadcast %27 : vector<1x16xf32> to vector<64x16xf32>
    %30 = arith.mulf %28, %29 : vector<64x16xf32>
    %31 = arith.addf %25, %30 : vector<64x16xf32>
    %32 = vector.extract_strided_slice %1 {offsets = [0, 0], sizes = [1, 16], strides = [1, 1]} : vector<1x128xf32> to vector<1x16xf32>
    %33 = vector.broadcast %32 : vector<1x16xf32> to vector<64x16xf32>
    %34 = arith.addf %31, %33 : vector<64x16xf32>
    %cst = arith.constant 0.000000e+00 : f32
    %35 = vector.broadcast %cst : f32 to vector<64x16xf32>
    %36 = arith.cmpf oge, %34, %35 : vector<64x16xf32>
    %cst_19 = arith.constant 0.00999999977 : f32
    %37 = vector.broadcast %cst_19 : f32 to vector<64x16xf32>
    %38 = arith.mulf %37, %34 : vector<64x16xf32>
    %39 = arith.select %36, %34, %38 : vector<64x16xi1>, vector<64x16xf32>
    %cst_20 = arith.constant dense<0.000000e+00> : vector<64x128xf32>
    %40 = tpu.matmul %39, %2, %cst_20 {dimension_numbers = #tpu.dot_dimension_numbers<[1], [0], [0], [1], [0, 0, 1, 1], [], []>} : vector<64x16xf32>, vector<16x128xf32>, vector<64x128xf32> -> vector<64x128xf32>
    %41 = vector.broadcast %4 : vector<1x128xf32> to vector<64x128xf32>
    %42 = arith.addf %40, %41 : vector<64x128xf32>
    %43 = vector.extract_strided_slice %18 {offsets = [56, 0], sizes = [8, 2], strides = [1, 1]} : vector<64x2xf32> to vector<8x2xf32>
    %44 = vector.extract_strided_slice %20 {offsets = [0, 0], sizes = [24, 2], strides = [1, 1]} : vector<32x2xf32> to vector<24x2xf32>
    %45 = tpu.concatenate %43, %44 in 0 : vector<8x2xf32>, vector<24x2xf32> -> vector<32x2xf32>
    %46 = vector.extract_strided_slice %45 {offsets = [0, 0], sizes = [32, 1], strides = [1, 1]} : vector<32x2xf32> to vector<32x1xf32>
    %47 = vector.extract_strided_slice %5 {offsets = [0, 0], sizes = [1, 128], strides = [1, 1]} : vector<2x128xf32> to vector<1x128xf32>
    %48 = vector.broadcast %46 : vector<32x1xf32> to vector<32x128xf32>
    %49 = vector.broadcast %47 : vector<1x128xf32> to vector<32x128xf32>
    %50 = arith.mulf %48, %49 : vector<32x128xf32>
    %51 = vector.extract_strided_slice %45 {offsets = [0, 1], sizes = [32, 1], strides = [1, 1]} : vector<32x2xf32> to vector<32x1xf32>
    %52 = vector.extract_strided_slice %5 {offsets = [1, 0], sizes = [1, 128], strides = [1, 1]} : vector<2x128xf32> to vector<1x128xf32>
    %53 = vector.broadcast %51 : vector<32x1xf32> to vector<32x128xf32>
    %54 = vector.broadcast %52 : vector<1x128xf32> to vector<32x128xf32>
    %55 = arith.mulf %53, %54 : vector<32x128xf32>
    %56 = arith.addf %50, %55 : vector<32x128xf32>
    %57 = vector.broadcast %7 : vector<1x128xf32> to vector<32x128xf32>
    %58 = arith.addf %56, %57 : vector<32x128xf32>
    %59 = arith.subf %20, %45 : vector<32x2xf32>
    %60 = tpu.iota {dimensions = array<i32: 1>} : vector<8x128xi32>
    %c64_i32 = arith.constant 64 : i32
    %61 = vector.broadcast %c64_i32 : i32 to vector<8x128xi32>
    %62 = arith.cmpi sge, %60, %61 : vector<8x128xi32>
    %c96_i32 = arith.constant 96 : i32
    %63 = vector.broadcast %c96_i32 : i32 to vector<8x128xi32>
    %64 = arith.cmpi slt, %60, %63 : vector<8x128xi32>
    %65 = arith.andi %62, %64 : vector<8x128xi1>
    %cst_21 = arith.constant 1.000000e+00 : f32
    %cst_22 = arith.constant 5.000000e-01 : f32
    %66 = vector.broadcast %cst_21 : f32 to vector<8x128xf32>
    %67 = vector.broadcast %cst_22 : f32 to vector<8x128xf32>
    %68 = arith.select %65, %66, %67 : vector<8x128xi1>, vector<8x128xf32>
    %cst_23 = arith.constant 0.000000e+00 : f32
    %69 = vector.broadcast %cst_23 : f32 to vector<8x32xf32>
    %cst_24 = arith.constant 0.000000e+00 : f32
    %70 = vector.broadcast %cst_24 : f32 to vector<8x32xf32>
    %71 = vector.extract_strided_slice %42 {offsets = [0, 0], sizes = [8, 128], strides = [1, 1]} : vector<64x128xf32> to vector<8x128xf32>
    %cst_25 = arith.constant dense<0.000000e+00> : vector<8x128xf32>
    %72 = tpu.matmul %69, %3, %cst_25 {dimension_numbers = #tpu.dot_dimension_numbers<[1], [0], [0], [1], [0, 0, 1, 1], [], []>} : vector<8x32xf32>, vector<32x128xf32>, vector<8x128xf32> -> vector<8x128xf32>
    %73 = arith.addf %71, %72 : vector<8x128xf32>
    %74 = arith.mulf %73, %68 : vector<8x128xf32>
    %75 = math.tanh %74 : vector<8x128xf32>
    %cst_26 = arith.constant 5.000000e-01 : f32
    %76 = vector.broadcast %cst_26 : f32 to vector<8x128xf32>
    %77 = arith.mulf %76, %75 : vector<8x128xf32>
    %cst_27 = arith.constant 5.000000e-01 : f32
    %78 = vector.broadcast %cst_27 : f32 to vector<8x128xf32>
    %79 = arith.addf %77, %78 : vector<8x128xf32>
    %80 = arith.select %65, %75, %79 : vector<8x128xi1>, vector<8x128xf32>
    %81 = vector.extract_strided_slice %80 {offsets = [0, 0], sizes = [8, 32], strides = [1, 1]} : vector<8x128xf32> to vector<8x32xf32>
    %82 = vector.extract_strided_slice %80 {offsets = [0, 32], sizes = [8, 32], strides = [1, 1]} : vector<8x128xf32> to vector<8x32xf32>
    %83 = vector.extract_strided_slice %80 {offsets = [0, 64], sizes = [8, 32], strides = [1, 1]} : vector<8x128xf32> to vector<8x32xf32>
    %84 = vector.extract_strided_slice %80 {offsets = [0, 96], sizes = [8, 32], strides = [1, 1]} : vector<8x128xf32> to vector<8x32xf32>
    %85 = arith.mulf %82, %70 : vector<8x32xf32>
    %86 = arith.mulf %81, %83 : vector<8x32xf32>
    %87 = arith.addf %85, %86 : vector<8x32xf32>
    %88 = math.tanh %87 : vector<8x32xf32>
    %89 = arith.mulf %84, %88 : vector<8x32xf32>
    %90 = vector.extract_strided_slice %42 {offsets = [8, 0], sizes = [8, 128], strides = [1, 1]} : vector<64x128xf32> to vector<8x128xf32>
    %cst_28 = arith.constant dense<0.000000e+00> : vector<8x128xf32>
    %91 = tpu.matmul %89, %3, %cst_28 {dimension_numbers = #tpu.dot_dimension_numbers<[1], [0], [0], [1], [0, 0, 1, 1], [], []>} : vector<8x32xf32>, vector<32x128xf32>, vector<8x128xf32> -> vector<8x128xf32>
    %92 = arith.addf %90, %91 : vector<8x128xf32>
    %93 = arith.mulf %92, %68 : vector<8x128xf32>
    %94 = math.tanh %93 : vector<8x128xf32>
    %cst_29 = arith.constant 5.000000e-01 : f32
    %95 = vector.broadcast %cst_29 : f32 to vector<8x128xf32>
    %96 = arith.mulf %95, %94 : vector<8x128xf32>
    %cst_30 = arith.constant 5.000000e-01 : f32
    %97 = vector.broadcast %cst_30 : f32 to vector<8x128xf32>
    %98 = arith.addf %96, %97 : vector<8x128xf32>
    %99 = arith.select %65, %94, %98 : vector<8x128xi1>, vector<8x128xf32>
    %100 = vector.extract_strided_slice %99 {offsets = [0, 0], sizes = [8, 32], strides = [1, 1]} : vector<8x128xf32> to vector<8x32xf32>
    %101 = vector.extract_strided_slice %99 {offsets = [0, 32], sizes = [8, 32], strides = [1, 1]} : vector<8x128xf32> to vector<8x32xf32>
    %102 = vector.extract_strided_slice %99 {offsets = [0, 64], sizes = [8, 32], strides = [1, 1]} : vector<8x128xf32> to vector<8x32xf32>
    %103 = vector.extract_strided_slice %99 {offsets = [0, 96], sizes = [8, 32], strides = [1, 1]} : vector<8x128xf32> to vector<8x32xf32>
    %104 = arith.mulf %101, %87 : vector<8x32xf32>
    %105 = arith.mulf %100, %102 : vector<8x32xf32>
    %106 = arith.addf %104, %105 : vector<8x32xf32>
    %107 = math.tanh %106 : vector<8x32xf32>
    %108 = arith.mulf %103, %107 : vector<8x32xf32>
    %109 = vector.extract_strided_slice %42 {offsets = [16, 0], sizes = [8, 128], strides = [1, 1]} : vector<64x128xf32> to vector<8x128xf32>
    %cst_31 = arith.constant dense<0.000000e+00> : vector<8x128xf32>
    %110 = tpu.matmul %108, %3, %cst_31 {dimension_numbers = #tpu.dot_dimension_numbers<[1], [0], [0], [1], [0, 0, 1, 1], [], []>} : vector<8x32xf32>, vector<32x128xf32>, vector<8x128xf32> -> vector<8x128xf32>
    %111 = arith.addf %109, %110 : vector<8x128xf32>
    %112 = arith.mulf %111, %68 : vector<8x128xf32>
    %113 = math.tanh %112 : vector<8x128xf32>
    %cst_32 = arith.constant 5.000000e-01 : f32
    %114 = vector.broadcast %cst_32 : f32 to vector<8x128xf32>
    %115 = arith.mulf %114, %113 : vector<8x128xf32>
    %cst_33 = arith.constant 5.000000e-01 : f32
    %116 = vector.broadcast %cst_33 : f32 to vector<8x128xf32>
    %117 = arith.addf %115, %116 : vector<8x128xf32>
    %118 = arith.select %65, %113, %117 : vector<8x128xi1>, vector<8x128xf32>
    %119 = vector.extract_strided_slice %118 {offsets = [0, 0], sizes = [8, 32], strides = [1, 1]} : vector<8x128xf32> to vector<8x32xf32>
    %120 = vector.extract_strided_slice %118 {offsets = [0, 32], sizes = [8, 32], strides = [1, 1]} : vector<8x128xf32> to vector<8x32xf32>
    %121 = vector.extract_strided_slice %118 {offsets = [0, 64], sizes = [8, 32], strides = [1, 1]} : vector<8x128xf32> to vector<8x32xf32>
    %122 = vector.extract_strided_slice %118 {offsets = [0, 96], sizes = [8, 32], strides = [1, 1]} : vector<8x128xf32> to vector<8x32xf32>
    %123 = arith.mulf %120, %106 : vector<8x32xf32>
    %124 = arith.mulf %119, %121 : vector<8x32xf32>
    %125 = arith.addf %123, %124 : vector<8x32xf32>
    %126 = math.tanh %125 : vector<8x32xf32>
    %127 = arith.mulf %122, %126 : vector<8x32xf32>
    %128 = vector.extract_strided_slice %42 {offsets = [24, 0], sizes = [8, 128], strides = [1, 1]} : vector<64x128xf32> to vector<8x128xf32>
    %cst_34 = arith.constant dense<0.000000e+00> : vector<8x128xf32>
    %129 = tpu.matmul %127, %3, %cst_34 {dimension_numbers = #tpu.dot_dimension_numbers<[1], [0], [0], [1], [0, 0, 1, 1], [], []>} : vector<8x32xf32>, vector<32x128xf32>, vector<8x128xf32> -> vector<8x128xf32>
    %130 = arith.addf %128, %129 : vector<8x128xf32>
    %131 = arith.mulf %130, %68 : vector<8x128xf32>
    %132 = math.tanh %131 : vector<8x128xf32>
    %cst_35 = arith.constant 5.000000e-01 : f32
    %133 = vector.broadcast %cst_35 : f32 to vector<8x128xf32>
    %134 = arith.mulf %133, %132 : vector<8x128xf32>
    %cst_36 = arith.constant 5.000000e-01 : f32
    %135 = vector.broadcast %cst_36 : f32 to vector<8x128xf32>
    %136 = arith.addf %134, %135 : vector<8x128xf32>
    %137 = arith.select %65, %132, %136 : vector<8x128xi1>, vector<8x128xf32>
    %138 = vector.extract_strided_slice %137 {offsets = [0, 0], sizes = [8, 32], strides = [1, 1]} : vector<8x128xf32> to vector<8x32xf32>
    %139 = vector.extract_strided_slice %137 {offsets = [0, 32], sizes = [8, 32], strides = [1, 1]} : vector<8x128xf32> to vector<8x32xf32>
    %140 = vector.extract_strided_slice %137 {offsets = [0, 64], sizes = [8, 32], strides = [1, 1]} : vector<8x128xf32> to vector<8x32xf32>
    %141 = vector.extract_strided_slice %137 {offsets = [0, 96], sizes = [8, 32], strides = [1, 1]} : vector<8x128xf32> to vector<8x32xf32>
    %142 = arith.mulf %139, %125 : vector<8x32xf32>
    %143 = arith.mulf %138, %140 : vector<8x32xf32>
    %144 = arith.addf %142, %143 : vector<8x32xf32>
    %145 = math.tanh %144 : vector<8x32xf32>
    %146 = arith.mulf %141, %145 : vector<8x32xf32>
    %147 = vector.extract_strided_slice %42 {offsets = [32, 0], sizes = [8, 128], strides = [1, 1]} : vector<64x128xf32> to vector<8x128xf32>
    %cst_37 = arith.constant dense<0.000000e+00> : vector<8x128xf32>
    %148 = tpu.matmul %146, %3, %cst_37 {dimension_numbers = #tpu.dot_dimension_numbers<[1], [0], [0], [1], [0, 0, 1, 1], [], []>} : vector<8x32xf32>, vector<32x128xf32>, vector<8x128xf32> -> vector<8x128xf32>
    %149 = arith.addf %147, %148 : vector<8x128xf32>
    %150 = arith.mulf %149, %68 : vector<8x128xf32>
    %151 = math.tanh %150 : vector<8x128xf32>
    %cst_38 = arith.constant 5.000000e-01 : f32
    %152 = vector.broadcast %cst_38 : f32 to vector<8x128xf32>
    %153 = arith.mulf %152, %151 : vector<8x128xf32>
    %cst_39 = arith.constant 5.000000e-01 : f32
    %154 = vector.broadcast %cst_39 : f32 to vector<8x128xf32>
    %155 = arith.addf %153, %154 : vector<8x128xf32>
    %156 = arith.select %65, %151, %155 : vector<8x128xi1>, vector<8x128xf32>
    %157 = vector.extract_strided_slice %156 {offsets = [0, 0], sizes = [8, 32], strides = [1, 1]} : vector<8x128xf32> to vector<8x32xf32>
    %158 = vector.extract_strided_slice %156 {offsets = [0, 32], sizes = [8, 32], strides = [1, 1]} : vector<8x128xf32> to vector<8x32xf32>
    %159 = vector.extract_strided_slice %156 {offsets = [0, 64], sizes = [8, 32], strides = [1, 1]} : vector<8x128xf32> to vector<8x32xf32>
    %160 = vector.extract_strided_slice %156 {offsets = [0, 96], sizes = [8, 32], strides = [1, 1]} : vector<8x128xf32> to vector<8x32xf32>
    %161 = arith.mulf %158, %144 : vector<8x32xf32>
    %162 = arith.mulf %157, %159 : vector<8x32xf32>
    %163 = arith.addf %161, %162 : vector<8x32xf32>
    %164 = math.tanh %163 : vector<8x32xf32>
    %165 = arith.mulf %160, %164 : vector<8x32xf32>
    %166 = vector.extract_strided_slice %42 {offsets = [40, 0], sizes = [8, 128], strides = [1, 1]} : vector<64x128xf32> to vector<8x128xf32>
    %cst_40 = arith.constant dense<0.000000e+00> : vector<8x128xf32>
    %167 = tpu.matmul %165, %3, %cst_40 {dimension_numbers = #tpu.dot_dimension_numbers<[1], [0], [0], [1], [0, 0, 1, 1], [], []>} : vector<8x32xf32>, vector<32x128xf32>, vector<8x128xf32> -> vector<8x128xf32>
    %168 = arith.addf %166, %167 : vector<8x128xf32>
    %169 = arith.mulf %168, %68 : vector<8x128xf32>
    %170 = math.tanh %169 : vector<8x128xf32>
    %cst_41 = arith.constant 5.000000e-01 : f32
    %171 = vector.broadcast %cst_41 : f32 to vector<8x128xf32>
    %172 = arith.mulf %171, %170 : vector<8x128xf32>
    %cst_42 = arith.constant 5.000000e-01 : f32
    %173 = vector.broadcast %cst_42 : f32 to vector<8x128xf32>
    %174 = arith.addf %172, %173 : vector<8x128xf32>
    %175 = arith.select %65, %170, %174 : vector<8x128xi1>, vector<8x128xf32>
    %176 = vector.extract_strided_slice %175 {offsets = [0, 0], sizes = [8, 32], strides = [1, 1]} : vector<8x128xf32> to vector<8x32xf32>
    %177 = vector.extract_strided_slice %175 {offsets = [0, 32], sizes = [8, 32], strides = [1, 1]} : vector<8x128xf32> to vector<8x32xf32>
    %178 = vector.extract_strided_slice %175 {offsets = [0, 64], sizes = [8, 32], strides = [1, 1]} : vector<8x128xf32> to vector<8x32xf32>
    %179 = vector.extract_strided_slice %175 {offsets = [0, 96], sizes = [8, 32], strides = [1, 1]} : vector<8x128xf32> to vector<8x32xf32>
    %180 = arith.mulf %177, %163 : vector<8x32xf32>
    %181 = arith.mulf %176, %178 : vector<8x32xf32>
    %182 = arith.addf %180, %181 : vector<8x32xf32>
    %183 = math.tanh %182 : vector<8x32xf32>
    %184 = arith.mulf %179, %183 : vector<8x32xf32>
    %185 = vector.extract_strided_slice %42 {offsets = [48, 0], sizes = [8, 128], strides = [1, 1]} : vector<64x128xf32> to vector<8x128xf32>
    %cst_43 = arith.constant dense<0.000000e+00> : vector<8x128xf32>
    %186 = tpu.matmul %184, %3, %cst_43 {dimension_numbers = #tpu.dot_dimension_numbers<[1], [0], [0], [1], [0, 0, 1, 1], [], []>} : vector<8x32xf32>, vector<32x128xf32>, vector<8x128xf32> -> vector<8x128xf32>
    %187 = arith.addf %185, %186 : vector<8x128xf32>
    %188 = arith.mulf %187, %68 : vector<8x128xf32>
    %189 = math.tanh %188 : vector<8x128xf32>
    %cst_44 = arith.constant 5.000000e-01 : f32
    %190 = vector.broadcast %cst_44 : f32 to vector<8x128xf32>
    %191 = arith.mulf %190, %189 : vector<8x128xf32>
    %cst_45 = arith.constant 5.000000e-01 : f32
    %192 = vector.broadcast %cst_45 : f32 to vector<8x128xf32>
    %193 = arith.addf %191, %192 : vector<8x128xf32>
    %194 = arith.select %65, %189, %193 : vector<8x128xi1>, vector<8x128xf32>
    %195 = vector.extract_strided_slice %194 {offsets = [0, 0], sizes = [8, 32], strides = [1, 1]} : vector<8x128xf32> to vector<8x32xf32>
    %196 = vector.extract_strided_slice %194 {offsets = [0, 32], sizes = [8, 32], strides = [1, 1]} : vector<8x128xf32> to vector<8x32xf32>
    %197 = vector.extract_strided_slice %194 {offsets = [0, 64], sizes = [8, 32], strides = [1, 1]} : vector<8x128xf32> to vector<8x32xf32>
    %198 = vector.extract_strided_slice %194 {offsets = [0, 96], sizes = [8, 32], strides = [1, 1]} : vector<8x128xf32> to vector<8x32xf32>
    %199 = arith.mulf %196, %182 : vector<8x32xf32>
    %200 = arith.mulf %195, %197 : vector<8x32xf32>
    %201 = arith.addf %199, %200 : vector<8x32xf32>
    %202 = math.tanh %201 : vector<8x32xf32>
    %203 = arith.mulf %198, %202 : vector<8x32xf32>
    %204 = vector.extract_strided_slice %42 {offsets = [56, 0], sizes = [8, 128], strides = [1, 1]} : vector<64x128xf32> to vector<8x128xf32>
    %cst_46 = arith.constant dense<0.000000e+00> : vector<8x128xf32>
    %205 = tpu.matmul %203, %3, %cst_46 {dimension_numbers = #tpu.dot_dimension_numbers<[1], [0], [0], [1], [0, 0, 1, 1], [], []>} : vector<8x32xf32>, vector<32x128xf32>, vector<8x128xf32> -> vector<8x128xf32>
    %206 = arith.addf %204, %205 : vector<8x128xf32>
    %207 = arith.mulf %206, %68 : vector<8x128xf32>
    %208 = math.tanh %207 : vector<8x128xf32>
    %cst_47 = arith.constant 5.000000e-01 : f32
    %209 = vector.broadcast %cst_47 : f32 to vector<8x128xf32>
    %210 = arith.mulf %209, %208 : vector<8x128xf32>
    %cst_48 = arith.constant 5.000000e-01 : f32
    %211 = vector.broadcast %cst_48 : f32 to vector<8x128xf32>
    %212 = arith.addf %210, %211 : vector<8x128xf32>
    %213 = arith.select %65, %208, %212 : vector<8x128xi1>, vector<8x128xf32>
    %214 = vector.extract_strided_slice %213 {offsets = [0, 0], sizes = [8, 32], strides = [1, 1]} : vector<8x128xf32> to vector<8x32xf32>
    %215 = vector.extract_strided_slice %213 {offsets = [0, 32], sizes = [8, 32], strides = [1, 1]} : vector<8x128xf32> to vector<8x32xf32>
    %216 = vector.extract_strided_slice %213 {offsets = [0, 64], sizes = [8, 32], strides = [1, 1]} : vector<8x128xf32> to vector<8x32xf32>
    %217 = vector.extract_strided_slice %213 {offsets = [0, 96], sizes = [8, 32], strides = [1, 1]} : vector<8x128xf32> to vector<8x32xf32>
    %218 = arith.mulf %215, %201 : vector<8x32xf32>
    %219 = arith.mulf %214, %216 : vector<8x32xf32>
    %220 = arith.addf %218, %219 : vector<8x32xf32>
    %221 = math.tanh %220 : vector<8x32xf32>
    %222 = arith.mulf %217, %221 : vector<8x32xf32>
    %223 = vector.extract_strided_slice %58 {offsets = [0, 0], sizes = [8, 128], strides = [1, 1]} : vector<32x128xf32> to vector<8x128xf32>
    %cst_49 = arith.constant dense<0.000000e+00> : vector<8x128xf32>
    %224 = tpu.matmul %222, %6, %cst_49 {dimension_numbers = #tpu.dot_dimension_numbers<[1], [0], [0], [1], [0, 0, 1, 1], [], []>} : vector<8x32xf32>, vector<32x128xf32>, vector<8x128xf32> -> vector<8x128xf32>
    %225 = vector.broadcast %8 : vector<1x128xf32> to vector<8x128xf32>
    %226 = arith.addf %224, %225 : vector<8x128xf32>
    %227 = vector.extract_strided_slice %223 {offsets = [0, 0], sizes = [8, 64], strides = [1, 1]} : vector<8x128xf32> to vector<8x64xf32>
    %228 = vector.extract_strided_slice %226 {offsets = [0, 0], sizes = [8, 64], strides = [1, 1]} : vector<8x128xf32> to vector<8x64xf32>
    %229 = arith.addf %227, %228 : vector<8x64xf32>
    %cst_50 = arith.constant 5.000000e-01 : f32
    %230 = vector.broadcast %cst_50 : f32 to vector<8x64xf32>
    %231 = arith.mulf %230, %229 : vector<8x64xf32>
    %232 = math.tanh %231 : vector<8x64xf32>
    %cst_51 = arith.constant 1.000000e+00 : f32
    %233 = vector.broadcast %cst_51 : f32 to vector<8x64xf32>
    %234 = arith.addf %232, %233 : vector<8x64xf32>
    %cst_52 = arith.constant 5.000000e-01 : f32
    %235 = vector.broadcast %cst_52 : f32 to vector<8x64xf32>
    %236 = arith.mulf %235, %234 : vector<8x64xf32>
    %237 = vector.extract_strided_slice %236 {offsets = [0, 0], sizes = [8, 32], strides = [1, 1]} : vector<8x64xf32> to vector<8x32xf32>
    %238 = vector.extract_strided_slice %236 {offsets = [0, 32], sizes = [8, 32], strides = [1, 1]} : vector<8x64xf32> to vector<8x32xf32>
    %239 = vector.extract_strided_slice %223 {offsets = [0, 64], sizes = [8, 32], strides = [1, 1]} : vector<8x128xf32> to vector<8x32xf32>
    %240 = vector.extract_strided_slice %226 {offsets = [0, 64], sizes = [8, 32], strides = [1, 1]} : vector<8x128xf32> to vector<8x32xf32>
    %241 = arith.mulf %237, %240 : vector<8x32xf32>
    %242 = arith.addf %239, %241 : vector<8x32xf32>
    %243 = math.tanh %242 : vector<8x32xf32>
    %cst_53 = arith.constant 1.000000e+00 : f32
    %244 = vector.broadcast %cst_53 : f32 to vector<8x32xf32>
    %245 = arith.subf %244, %238 : vector<8x32xf32>
    %246 = arith.mulf %245, %243 : vector<8x32xf32>
    %247 = arith.mulf %238, %222 : vector<8x32xf32>
    %248 = arith.addf %246, %247 : vector<8x32xf32>
    %249 = vector.extract_strided_slice %58 {offsets = [8, 0], sizes = [8, 128], strides = [1, 1]} : vector<32x128xf32> to vector<8x128xf32>
    %cst_54 = arith.constant dense<0.000000e+00> : vector<8x128xf32>
    %250 = tpu.matmul %248, %6, %cst_54 {dimension_numbers = #tpu.dot_dimension_numbers<[1], [0], [0], [1], [0, 0, 1, 1], [], []>} : vector<8x32xf32>, vector<32x128xf32>, vector<8x128xf32> -> vector<8x128xf32>
    %251 = vector.broadcast %8 : vector<1x128xf32> to vector<8x128xf32>
    %252 = arith.addf %250, %251 : vector<8x128xf32>
    %253 = vector.extract_strided_slice %249 {offsets = [0, 0], sizes = [8, 64], strides = [1, 1]} : vector<8x128xf32> to vector<8x64xf32>
    %254 = vector.extract_strided_slice %252 {offsets = [0, 0], sizes = [8, 64], strides = [1, 1]} : vector<8x128xf32> to vector<8x64xf32>
    %255 = arith.addf %253, %254 : vector<8x64xf32>
    %cst_55 = arith.constant 5.000000e-01 : f32
    %256 = vector.broadcast %cst_55 : f32 to vector<8x64xf32>
    %257 = arith.mulf %256, %255 : vector<8x64xf32>
    %258 = math.tanh %257 : vector<8x64xf32>
    %cst_56 = arith.constant 1.000000e+00 : f32
    %259 = vector.broadcast %cst_56 : f32 to vector<8x64xf32>
    %260 = arith.addf %258, %259 : vector<8x64xf32>
    %cst_57 = arith.constant 5.000000e-01 : f32
    %261 = vector.broadcast %cst_57 : f32 to vector<8x64xf32>
    %262 = arith.mulf %261, %260 : vector<8x64xf32>
    %263 = vector.extract_strided_slice %262 {offsets = [0, 0], sizes = [8, 32], strides = [1, 1]} : vector<8x64xf32> to vector<8x32xf32>
    %264 = vector.extract_strided_slice %262 {offsets = [0, 32], sizes = [8, 32], strides = [1, 1]} : vector<8x64xf32> to vector<8x32xf32>
    %265 = vector.extract_strided_slice %249 {offsets = [0, 64], sizes = [8, 32], strides = [1, 1]} : vector<8x128xf32> to vector<8x32xf32>
    %266 = vector.extract_strided_slice %252 {offsets = [0, 64], sizes = [8, 32], strides = [1, 1]} : vector<8x128xf32> to vector<8x32xf32>
    %267 = arith.mulf %263, %266 : vector<8x32xf32>
    %268 = arith.addf %265, %267 : vector<8x32xf32>
    %269 = math.tanh %268 : vector<8x32xf32>
    %cst_58 = arith.constant 1.000000e+00 : f32
    %270 = vector.broadcast %cst_58 : f32 to vector<8x32xf32>
    %271 = arith.subf %270, %264 : vector<8x32xf32>
    %272 = arith.mulf %271, %269 : vector<8x32xf32>
    %273 = arith.mulf %264, %248 : vector<8x32xf32>
    %274 = arith.addf %272, %273 : vector<8x32xf32>
    %275 = vector.extract_strided_slice %58 {offsets = [16, 0], sizes = [8, 128], strides = [1, 1]} : vector<32x128xf32> to vector<8x128xf32>
    %cst_59 = arith.constant dense<0.000000e+00> : vector<8x128xf32>
    %276 = tpu.matmul %274, %6, %cst_59 {dimension_numbers = #tpu.dot_dimension_numbers<[1], [0], [0], [1], [0, 0, 1, 1], [], []>} : vector<8x32xf32>, vector<32x128xf32>, vector<8x128xf32> -> vector<8x128xf32>
    %277 = vector.broadcast %8 : vector<1x128xf32> to vector<8x128xf32>
    %278 = arith.addf %276, %277 : vector<8x128xf32>
    %279 = vector.extract_strided_slice %275 {offsets = [0, 0], sizes = [8, 64], strides = [1, 1]} : vector<8x128xf32> to vector<8x64xf32>
    %280 = vector.extract_strided_slice %278 {offsets = [0, 0], sizes = [8, 64], strides = [1, 1]} : vector<8x128xf32> to vector<8x64xf32>
    %281 = arith.addf %279, %280 : vector<8x64xf32>
    %cst_60 = arith.constant 5.000000e-01 : f32
    %282 = vector.broadcast %cst_60 : f32 to vector<8x64xf32>
    %283 = arith.mulf %282, %281 : vector<8x64xf32>
    %284 = math.tanh %283 : vector<8x64xf32>
    %cst_61 = arith.constant 1.000000e+00 : f32
    %285 = vector.broadcast %cst_61 : f32 to vector<8x64xf32>
    %286 = arith.addf %284, %285 : vector<8x64xf32>
    %cst_62 = arith.constant 5.000000e-01 : f32
    %287 = vector.broadcast %cst_62 : f32 to vector<8x64xf32>
    %288 = arith.mulf %287, %286 : vector<8x64xf32>
    %289 = vector.extract_strided_slice %288 {offsets = [0, 0], sizes = [8, 32], strides = [1, 1]} : vector<8x64xf32> to vector<8x32xf32>
    %290 = vector.extract_strided_slice %288 {offsets = [0, 32], sizes = [8, 32], strides = [1, 1]} : vector<8x64xf32> to vector<8x32xf32>
    %291 = vector.extract_strided_slice %275 {offsets = [0, 64], sizes = [8, 32], strides = [1, 1]} : vector<8x128xf32> to vector<8x32xf32>
    %292 = vector.extract_strided_slice %278 {offsets = [0, 64], sizes = [8, 32], strides = [1, 1]} : vector<8x128xf32> to vector<8x32xf32>
    %293 = arith.mulf %289, %292 : vector<8x32xf32>
    %294 = arith.addf %291, %293 : vector<8x32xf32>
    %295 = math.tanh %294 : vector<8x32xf32>
    %cst_63 = arith.constant 1.000000e+00 : f32
    %296 = vector.broadcast %cst_63 : f32 to vector<8x32xf32>
    %297 = arith.subf %296, %290 : vector<8x32xf32>
    %298 = arith.mulf %297, %295 : vector<8x32xf32>
    %299 = arith.mulf %290, %274 : vector<8x32xf32>
    %300 = arith.addf %298, %299 : vector<8x32xf32>
    %301 = vector.extract_strided_slice %58 {offsets = [24, 0], sizes = [8, 128], strides = [1, 1]} : vector<32x128xf32> to vector<8x128xf32>
    %cst_64 = arith.constant dense<0.000000e+00> : vector<8x128xf32>
    %302 = tpu.matmul %300, %6, %cst_64 {dimension_numbers = #tpu.dot_dimension_numbers<[1], [0], [0], [1], [0, 0, 1, 1], [], []>} : vector<8x32xf32>, vector<32x128xf32>, vector<8x128xf32> -> vector<8x128xf32>
    %303 = vector.broadcast %8 : vector<1x128xf32> to vector<8x128xf32>
    %304 = arith.addf %302, %303 : vector<8x128xf32>
    %305 = vector.extract_strided_slice %301 {offsets = [0, 0], sizes = [8, 64], strides = [1, 1]} : vector<8x128xf32> to vector<8x64xf32>
    %306 = vector.extract_strided_slice %304 {offsets = [0, 0], sizes = [8, 64], strides = [1, 1]} : vector<8x128xf32> to vector<8x64xf32>
    %307 = arith.addf %305, %306 : vector<8x64xf32>
    %cst_65 = arith.constant 5.000000e-01 : f32
    %308 = vector.broadcast %cst_65 : f32 to vector<8x64xf32>
    %309 = arith.mulf %308, %307 : vector<8x64xf32>
    %310 = math.tanh %309 : vector<8x64xf32>
    %cst_66 = arith.constant 1.000000e+00 : f32
    %311 = vector.broadcast %cst_66 : f32 to vector<8x64xf32>
    %312 = arith.addf %310, %311 : vector<8x64xf32>
    %cst_67 = arith.constant 5.000000e-01 : f32
    %313 = vector.broadcast %cst_67 : f32 to vector<8x64xf32>
    %314 = arith.mulf %313, %312 : vector<8x64xf32>
    %315 = vector.extract_strided_slice %314 {offsets = [0, 0], sizes = [8, 32], strides = [1, 1]} : vector<8x64xf32> to vector<8x32xf32>
    %316 = vector.extract_strided_slice %314 {offsets = [0, 32], sizes = [8, 32], strides = [1, 1]} : vector<8x64xf32> to vector<8x32xf32>
    %317 = vector.extract_strided_slice %301 {offsets = [0, 64], sizes = [8, 32], strides = [1, 1]} : vector<8x128xf32> to vector<8x32xf32>
    %318 = vector.extract_strided_slice %304 {offsets = [0, 64], sizes = [8, 32], strides = [1, 1]} : vector<8x128xf32> to vector<8x32xf32>
    %319 = arith.mulf %315, %318 : vector<8x32xf32>
    %320 = arith.addf %317, %319 : vector<8x32xf32>
    %321 = math.tanh %320 : vector<8x32xf32>
    %cst_68 = arith.constant 1.000000e+00 : f32
    %322 = vector.broadcast %cst_68 : f32 to vector<8x32xf32>
    %323 = arith.subf %322, %316 : vector<8x32xf32>
    %324 = arith.mulf %323, %321 : vector<8x32xf32>
    %325 = arith.mulf %316, %300 : vector<8x32xf32>
    %326 = arith.addf %324, %325 : vector<8x32xf32>
    %327 = tpu.concatenate %248, %274, %300, %326 in 0 : vector<8x32xf32>, vector<8x32xf32>, vector<8x32xf32>, vector<8x32xf32> -> vector<32x32xf32>
    %cst_69 = arith.constant dense<0.000000e+00> : vector<32x32xf32>
    %328 = tpu.matmul %327, %10, %cst_69 {dimension_numbers = #tpu.dot_dimension_numbers<[1], [0], [0], [1], [0, 0, 1, 1], [], []>} : vector<32x32xf32>, vector<32x32xf32>, vector<32x32xf32> -> vector<32x32xf32>
    %329 = vector.broadcast %12 : vector<1x32xf32> to vector<32x32xf32>
    %330 = arith.addf %328, %329 : vector<32x32xf32>
    %cst_70 = arith.constant 0.000000e+00 : f32
    %331 = vector.broadcast %cst_70 : f32 to vector<32x32xf32>
    %332 = arith.maximumf %330, %331 : vector<32x32xf32>
    %cst_71 = arith.constant dense<0.000000e+00> : vector<32x4xf32>
    %333 = tpu.matmul %332, %14, %cst_71 {dimension_numbers = #tpu.dot_dimension_numbers<[1], [0], [0], [1], [0, 0, 1, 1], [], []>} : vector<32x32xf32>, vector<32x4xf32>, vector<32x4xf32> -> vector<32x4xf32>
    %334 = vector.broadcast %16 : vector<1x4xf32> to vector<32x4xf32>
    %335 = arith.addf %333, %334 : vector<32x4xf32>
    %336 = vector.extract_strided_slice %335 {offsets = [0, 0], sizes = [32, 2], strides = [1, 1]} : vector<32x4xf32> to vector<32x2xf32>
    %337 = vector.extract_strided_slice %335 {offsets = [0, 2], sizes = [32, 2], strides = [1, 1]} : vector<32x4xf32> to vector<32x2xf32>
    %cst_72 = arith.constant 0.000000e+00 : f32
    %338 = vector.broadcast %cst_72 : f32 to vector<32x2xf32>
    %339 = arith.maximumf %337, %338 : vector<32x2xf32>
    %340 = math.absf %337 : vector<32x2xf32>
    %cst_73 = arith.constant 0.000000e+00 : f32
    %341 = vector.broadcast %cst_73 : f32 to vector<32x2xf32>
    %342 = arith.subf %341, %340 : vector<32x2xf32>
    %343 = math.exp %342 : vector<32x2xf32>
    %344 = math.log1p %343 : vector<32x2xf32>
    %345 = arith.addf %339, %344 : vector<32x2xf32>
    %cst_74 = arith.constant 1.000000e-03 : f32
    %346 = vector.broadcast %cst_74 : f32 to vector<32x2xf32>
    %347 = arith.addf %345, %346 : vector<32x2xf32>
    %348 = arith.subf %59, %336 : vector<32x2xf32>
    %349 = arith.divf %348, %347 : vector<32x2xf32>
    %350 = arith.mulf %349, %349 : vector<32x2xf32>
    %351 = math.log %347 : vector<32x2xf32>
    %cst_75 = arith.constant 0.000000e+00 : f32
    %352 = vector.broadcast %cst_75 : f32 to vector<8x2xf32>
    %cst_76 = arith.constant 0.000000e+00 : f32
    %353 = vector.broadcast %cst_76 : f32 to vector<8x2xf32>
    %354 = vector.extract_strided_slice %350 {offsets = [0, 0], sizes = [8, 2], strides = [1, 1]} : vector<32x2xf32> to vector<8x2xf32>
    %355 = arith.addf %352, %354 : vector<8x2xf32>
    %356 = vector.extract_strided_slice %351 {offsets = [0, 0], sizes = [8, 2], strides = [1, 1]} : vector<32x2xf32> to vector<8x2xf32>
    %357 = arith.addf %353, %356 : vector<8x2xf32>
    %358 = vector.extract_strided_slice %350 {offsets = [8, 0], sizes = [8, 2], strides = [1, 1]} : vector<32x2xf32> to vector<8x2xf32>
    %359 = arith.addf %355, %358 : vector<8x2xf32>
    %360 = vector.extract_strided_slice %351 {offsets = [8, 0], sizes = [8, 2], strides = [1, 1]} : vector<32x2xf32> to vector<8x2xf32>
    %361 = arith.addf %357, %360 : vector<8x2xf32>
    %362 = vector.extract_strided_slice %350 {offsets = [16, 0], sizes = [8, 2], strides = [1, 1]} : vector<32x2xf32> to vector<8x2xf32>
    %363 = arith.addf %359, %362 : vector<8x2xf32>
    %364 = vector.extract_strided_slice %351 {offsets = [16, 0], sizes = [8, 2], strides = [1, 1]} : vector<32x2xf32> to vector<8x2xf32>
    %365 = arith.addf %361, %364 : vector<8x2xf32>
    %366 = vector.extract_strided_slice %350 {offsets = [24, 0], sizes = [8, 2], strides = [1, 1]} : vector<32x2xf32> to vector<8x2xf32>
    %367 = arith.addf %363, %366 : vector<8x2xf32>
    %368 = vector.extract_strided_slice %351 {offsets = [24, 0], sizes = [8, 2], strides = [1, 1]} : vector<32x2xf32> to vector<8x2xf32>
    %369 = arith.addf %365, %368 : vector<8x2xf32>
    %370 = vector.extract_strided_slice %367 {offsets = [0, 0], sizes = [8, 1], strides = [1, 1]} : vector<8x2xf32> to vector<8x1xf32>
    %371 = vector.extract_strided_slice %367 {offsets = [0, 1], sizes = [8, 1], strides = [1, 1]} : vector<8x2xf32> to vector<8x1xf32>
    %372 = arith.addf %370, %371 : vector<8x1xf32>
    %cst_77 = arith.constant -5.000000e-01 : f32
    %373 = vector.broadcast %cst_77 : f32 to vector<8x1xf32>
    %374 = arith.mulf %373, %372 : vector<8x1xf32>
    %cst_78 = arith.constant 7.35150814 : f32
    %375 = vector.broadcast %cst_78 : f32 to vector<8x1xf32>
    %376 = arith.subf %374, %375 : vector<8x1xf32>
    %377 = vector.extract_strided_slice %369 {offsets = [0, 0], sizes = [8, 1], strides = [1, 1]} : vector<8x2xf32> to vector<8x1xf32>
    %378 = vector.extract_strided_slice %369 {offsets = [0, 1], sizes = [8, 1], strides = [1, 1]} : vector<8x2xf32> to vector<8x1xf32>
    %379 = arith.addf %377, %378 : vector<8x1xf32>
    %cst_79 = arith.constant 0.000000e+00 : f32
    %380 = vector.broadcast %cst_79 : f32 to vector<8x1xf32>
    %381 = arith.subf %380, %379 : vector<8x1xf32>
    %382 = tpu.iota {dimensions = array<i32: 1>} : vector<8x2xi32>
    %c0_i32 = arith.constant 0 : i32
    %383 = vector.broadcast %c0_i32 : i32 to vector<8x2xi32>
    %384 = arith.cmpi eq, %382, %383 : vector<8x2xi32>
    %385 = vector.shape_cast %376 : vector<8x1xf32> to vector<8x1xf32>
    %386 = vector.broadcast %385 : vector<8x1xf32> to vector<8x2xf32>
    %387 = vector.shape_cast %381 : vector<8x1xf32> to vector<8x1xf32>
    %388 = vector.broadcast %387 : vector<8x1xf32> to vector<8x2xf32>
    %389 = arith.select %384, %386, %388 : vector<8x2xi1>, vector<8x2xf32>
    %c0_80 = arith.constant 0 : index
    %c0_81 = arith.constant 0 : index
    %390 = vector.load %arg4[%c0_80, %c0_81] : memref<8x2xf32, #tpu.memory_space<vmem>>, vector<8x2xf32>
    tpu.vector_store %arg4[%c0_80, %c0_81], %389 {strides = array<i32>} : memref<8x2xf32, #tpu.memory_space<vmem>>, vector<8x2xf32>,
    return
  }
  func.func @transform_0(%arg0: i32) -> (i32, i32, i32) {
    %c0_i32 = arith.constant 0 : i32
    %c0_i32_0 = arith.constant 0 : i32
    %c0_i32_1 = arith.constant 0 : i32
    return %c0_i32, %arg0, %c0_i32_0 : i32, i32, i32
  }
  func.func @transform_1(%arg0: i32) -> (i32, i32, i32) {
    %c0_i32 = arith.constant 0 : i32
    %c0_i32_0 = arith.constant 0 : i32
    %c0_i32_1 = arith.constant 0 : i32
    return %c0_i32, %arg0, %c0_i32_0 : i32, i32, i32
  }
  func.func @transform_2(%arg0: i32) -> (i32, i32) {
    %c0_i32 = arith.constant 0 : i32
    %c0_i32_0 = arith.constant 0 : i32
    %c0_i32_1 = arith.constant 0 : i32
    return %c0_i32, %c0_i32_0 : i32, i32
  }
  func.func @transform_3(%arg0: i32) -> (i32, i32) {
    %c0_i32 = arith.constant 0 : i32
    %c0_i32_0 = arith.constant 0 : i32
    return %arg0, %c0_i32 : i32, i32
  }
}

</mosaic_0001>

<llo_original>
// kernel: tpu_custom_call.1
$region0: #{tpu_custom_call.1}
  #allocation0 [shape = 'u32[]', space=smem, size = 0x4, offset = 0x4, fixed_abs, tag = 'smem constant byte address 0x4 - core index']
  #allocation1 [shape = 'u32[144,128]{1,0:T(1,128)}', space=vmem, size = 0x12000, scoped, tag = 'internal scratch']
  %s0 = inlined_call_operand.vmem [shape: f32[8,8,2], index: 0, kind: input, shape index: {}]
  %s1 = inlined_call_operand.vmem [shape: f32[4,8,2], index: 1, kind: input, shape index: {}]
  %s2 = inlined_call_operand.hbm [shape: f32[208,128], index: 2, kind: input, shape index: {}]
  %s3 = inlined_call_operand.vmem [shape: f32[8,2], index: 3, kind: output, shape index: {}]
  %s4 = sld [smem:[#allocation0]]
  $region26: #{tpu_custom_call.1} parent=0
    _
  %s6 = ssub.s32 1, %s4
  %s7 = scalar_select 0, %s6, %s4
  $region1: #{tpu_custom_call.1} parent=0
    #allocation2 [shape = 'u8[106496]{0}', space=vmem, size = 0x1a000, scoped, tag = 'input window, operand 2, single buffered']
    #allocation3 [shape = 's32[1]{0}', space=sflag, size = 0x4, scoped, tag = 'scoped memory for tpu_custom_call.1']
    %8 = vsyncpa [#allocation3], 0
    // Predicated region
    $region2: #{tpu_custom_call.1} parent=1 // pred_check
      _
    $region3: #{tpu_custom_call.1} parent=1 // pred_check_branch
      %10 = sbr.rel (0) target = $region5
    $region4: #{tpu_custom_call.1} parent=1 // pred_region
      _
    $region5: #{tpu_custom_call.1} parent=1 // pred_fallthru
      _
    // Predicated region
    $region6: #{tpu_custom_call.1} parent=1 // pred_check
      _
    $region7: #{tpu_custom_call.1} parent=1 // pred_check_branch
      %12 = sbr.rel (0) target = $region9
    $region8: #{tpu_custom_call.1} parent=1 // pred_region
      _
    $region9: #{tpu_custom_call.1} parent=1 // pred_fallthru
      _
    // Predicated region
    $region10: #{tpu_custom_call.1} parent=1 // pred_check
      _
    $region11: #{tpu_custom_call.1} parent=1 // pred_check_branch
      %14 = sbr.rel (0) target = $region13
    $region12: #{tpu_custom_call.1} parent=1 // pred_region
      %s16 = ssub.s32 3328, 3328
      %17 = vsyncadd [#allocation3], %s16
      %s18 = sshll.u32 [#allocation2], 4
      %s19 = int_to_ptr.vmem [resolvable:$true] %s18
      %24 = dma.hbm_to_vmem [thread:$0]  %s2, 3328, %s19, [#allocation3], 128, 128, 8
    $region13: #{tpu_custom_call.1} parent=1 // pred_fallthru
      _
    // Predicated region
    $region14: #{tpu_custom_call.1} parent=1 // pred_check
      _
    $region15: #{tpu_custom_call.1} parent=1 // pred_check_branch
      %26 = sbr.rel (0) target = $region17
    $region16: #{tpu_custom_call.1} parent=1 // pred_region
      %27 = dma.done [#allocation3], 3328
    $region17: #{tpu_custom_call.1} parent=1 // pred_fallthru
      _
    %v28 = vld [vmem:[#allocation2] sm:$0x3]
    %v29 = vld [vmem:[#allocation2 + $0x8] sm:$0x1]
    %v30 = vld [vmem:[#allocation2 + $0x10] sm:$0xff]
    %v31 = vld [vmem:[#allocation2 + $0x18] sm:$0xff]
    %v32 = vld [vmem:[#allocation2 + $0x20] sm:$0xff]
    %v33 = vld [vmem:[#allocation2 + $0x28] sm:$0xff]
    %v34 = vld [vmem:[#allocation2 + $0x30] sm:$0xff]
    %v35 = vld [vmem:[#allocation2 + $0x38] sm:$0xff]
    %v36 = vld [vmem:[#allocation2 + $0x40] sm:$0x1]
    %v37 = vld [vmem:[#allocation2 + $0x48] sm:$0x3]
    %v38 = vld [vmem:[#allocation2 + $0x50] sm:$0xff]
    %v39 = vld [vmem:[#allocation2 + $0x58] sm:$0xff]
    %v40 = vld [vmem:[#allocation2 + $0x60] sm:$0xff]
    %v41 = vld [vmem:[#allocation2 + $0x68] sm:$0xff]
    %v42 = vld [vmem:[#allocation2 + $0x70] sm:$0x1]
    %v43 = vld [vmem:[#allocation2 + $0x78] sm:$0x1]
    %v44 = vld [vmem:[#allocation2 + $0x80] sm:$0xff]
    %v45 = vld [vmem:[#allocation2 + $0x88] sm:$0xff]
    %v46 = vld [vmem:[#allocation2 + $0x90] sm:$0xff]
    %v47 = vld [vmem:[#allocation2 + $0x98] sm:$0xff]
    %v48 = vld [vmem:[#allocation2 + $0xa0] sm:$0x1]
    %v49 = vld [vmem:[#allocation2 + $0xa8] sm:$0xff]
    %v50 = vld [vmem:[#allocation2 + $0xb0] sm:$0xff]
    %v51 = vld [vmem:[#allocation2 + $0xb8] sm:$0xff]
    %v52 = vld [vmem:[#allocation2 + $0xc0] sm:$0xff]
    %v53 = vld [vmem:[#allocation2 + $0xc8] sm:$0x1]
    %v54 = vld [vmem:[%s0] sm:$0xff]
    %v55 = vld [vmem:[%s0 + $0x8] sm:$0xff]
    %v56 = vld [vmem:[%s0 + $0x10] sm:$0xff]
    %v57 = vld [vmem:[%s0 + $0x18] sm:$0xff]
    %v58 = vld [vmem:[%s0 + $0x20] sm:$0xff]
    %v59 = vld [vmem:[%s0 + $0x28] sm:$0xff]
    %v60 = vld [vmem:[%s0 + $0x30] sm:$0xff]
    %v61 = vld [vmem:[%s0 + $0x38] sm:$0xff]
    %v62 = vld [vmem:[%s1] sm:$0xff]
    %v63 = vld [vmem:[%s1 + $0x8] sm:$0xff]
    %v64 = vld [vmem:[%s1 + $0x10] sm:$0xff]
    %v65 = vld [vmem:[%s1 + $0x18] sm:$0xff]
    %67 = vset.pattern.permute.xlu0 0
    %68 = vperm.xlu0 %67, %v54
    %v69 = vpop.permute.xlu0 %68
    %72 = vset.pattern.permute.xlu0 0
    %73 = vperm.xlu0 %72, %v55
    %v74 = vpop.permute.xlu0 %73
    %77 = vset.pattern.permute.xlu0 0
    %78 = vperm.xlu0 %77, %v56
    %v79 = vpop.permute.xlu0 %78
    %82 = vset.pattern.permute.xlu0 0
    %83 = vperm.xlu0 %82, %v57
    %v84 = vpop.permute.xlu0 %83
    %87 = vset.pattern.permute.xlu0 0
    %88 = vperm.xlu0 %87, %v58
    %v89 = vpop.permute.xlu0 %88
    %92 = vset.pattern.permute.xlu0 0
    %93 = vperm.xlu0 %92, %v59
    %v94 = vpop.permute.xlu0 %93
    %97 = vset.pattern.permute.xlu0 0
    %98 = vperm.xlu0 %97, %v60
    %v99 = vpop.permute.xlu0 %98
    %102 = vset.pattern.permute.xlu0 0
    %103 = vperm.xlu0 %102, %v61
    %v104 = vpop.permute.xlu0 %103
    %v106 = vlaneseq
    %v107 = vshrl.u32 %v106, 7
    %v108 = vsub.s32 0, %v107
    %v109 = vrot.slane %v28, %v108
    %v110 = vmul.f32 %v69, %v109
    %v111 = vmul.f32 %v74, %v109
    %v112 = vmul.f32 %v79, %v109
    %v113 = vmul.f32 %v84, %v109
    %v114 = vmul.f32 %v89, %v109
    %v115 = vmul.f32 %v94, %v109
    %v116 = vmul.f32 %v99, %v109
    %v117 = vmul.f32 %v104, %v109
    %118 = vset.pattern.permute.xlu0 1
    %119 = vperm.xlu0 %118, %v54
    %v120 = vpop.permute.xlu0 %119
    %122 = vset.pattern.permute.xlu0 1
    %123 = vperm.xlu0 %122, %v55
    %v124 = vpop.permute.xlu0 %123
    %126 = vset.pattern.permute.xlu0 1
    %127 = vperm.xlu0 %126, %v56
    %v128 = vpop.permute.xlu0 %127
    %130 = vset.pattern.permute.xlu0 1
    %131 = vperm.xlu0 %130, %v57
    %v132 = vpop.permute.xlu0 %131
    %134 = vset.pattern.permute.xlu0 1
    %135 = vperm.xlu0 %134, %v58
    %v136 = vpop.permute.xlu0 %135
    %138 = vset.pattern.permute.xlu0 1
    %139 = vperm.xlu0 %138, %v59
    %v140 = vpop.permute.xlu0 %139
    %142 = vset.pattern.permute.xlu0 1
    %143 = vperm.xlu0 %142, %v60
    %v144 = vpop.permute.xlu0 %143
    %146 = vset.pattern.permute.xlu0 1
    %147 = vperm.xlu0 %146, %v61
    %v148 = vpop.permute.xlu0 %147
    %v150 = vlaneseq
    %v151 = vshrl.u32 %v150, 7
    %v152 = vsub.s32 1, %v151
    %v153 = vrot.slane %v28, %v152
    %v154 = vmul.f32 %v120, %v153
    %v155 = vmul.f32 %v124, %v153
    %v156 = vmul.f32 %v128, %v153
    %v157 = vmul.f32 %v132, %v153
    %v158 = vmul.f32 %v136, %v153
    %v159 = vmul.f32 %v140, %v153
    %v160 = vmul.f32 %v144, %v153
    %v161 = vmul.f32 %v148, %v153
    %v162 = vadd.f32 %v110, %v154
    %v163 = vadd.f32 %v111, %v155
    %v164 = vadd.f32 %v112, %v156
    %v165 = vadd.f32 %v113, %v157
    %v166 = vadd.f32 %v114, %v158
    %v167 = vadd.f32 %v115, %v159
    %v168 = vadd.f32 %v116, %v160
    %v169 = vadd.f32 %v117, %v161
    %v170 = vlaneseq
    %v171 = vshrl.u32 %v170, 7
    %v172 = vsub.s32 0, %v171
    %v173 = vrot.slane %v29, %v172
    %v174 = vadd.f32 %v162, %v173
    %v175 = vadd.f32 %v163, %v173
    %v176 = vadd.f32 %v164, %v173
    %v177 = vadd.f32 %v165, %v173
    %v178 = vadd.f32 %v166, %v173
    %v179 = vadd.f32 %v167, %v173
    %v180 = vadd.f32 %v168, %v173
    %v181 = vadd.f32 %v169, %v173
    %vm182 = vcmp.ge.f32.partialorder %v174, 0.0
    %vm183 = vcmp.ge.f32.partialorder %v175, 0.0
    %vm184 = vcmp.ge.f32.partialorder %v176, 0.0
    %vm185 = vcmp.ge.f32.partialorder %v177, 0.0
    %vm186 = vcmp.ge.f32.partialorder %v178, 0.0
    %vm187 = vcmp.ge.f32.partialorder %v179, 0.0
    %vm188 = vcmp.ge.f32.partialorder %v180, 0.0
    %vm189 = vcmp.ge.f32.partialorder %v181, 0.0
    %v190 = vmul.f32 %v174, 0.01
    %v191 = vmul.f32 %v175, 0.01
    %v192 = vmul.f32 %v176, 0.01
    %v193 = vmul.f32 %v177, 0.01
    %v194 = vmul.f32 %v178, 0.01
    %v195 = vmul.f32 %v179, 0.01
    %v196 = vmul.f32 %v180, 0.01
    %v197 = vmul.f32 %v181, 0.01
    %v198 = vsel %vm182, %v174, %v190
    %v199 = vsel %vm183, %v175, %v191
    %v200 = vsel %vm184, %v176, %v192
    %v201 = vsel %vm185, %v177, %v193
    %v202 = vsel %vm186, %v178, %v194
    %v203 = vsel %vm187, %v179, %v195
    %v204 = vsel %vm188, %v180, %v196
    %v205 = vsel %vm189, %v181, %v197
    %v206 = vlaneseq
    %v207 = vshrl.u32 %v206, 7
    %v208 = vsub.s32 0, %v207
    %v209 = vrot.slane %v36, %v208
    %vm210 = vcmask 130048
    %v212 = vsel %vm210, %v198, 0
    %v215 = vsel %vm210, %v199, 0
    %v218 = vsel %vm210, %v200, 0
    %v221 = vsel %vm210, %v201, 0
    %v224 = vsel %vm210, %v202, 0
    %v227 = vsel %vm210, %v203, 0
    %v230 = vsel %vm210, %v204, 0
    %v233 = vsel %vm210, %v205, 0
    %235 = vmatprep.subr.mxu0 0.0
    %236 = vmatpush1.msra.mxu0 0.0
    %237 = vmatprep.subr.mxu0 0.0
    %238 = vmatpush1.msra.mxu0 0.0
    %239 = vmatprep.subr.mxu0 0.0
    %240 = vmatpush1.msra.mxu0 0.0
    %241 = vmatprep.subr.mxu0 0.0
    %242 = vmatpush1.msra.mxu0 0.0
    %243 = vmatprep.subr.mxu0 0.0
    %244 = vmatpush1.msra.mxu0 0.0
    %245 = vmatprep.subr.mxu0 0.0
    %246 = vmatpush1.msra.mxu0 0.0
    %247 = vmatprep.subr.mxu0 0.0
    %248 = vmatpush1.msra.mxu0 0.0
    %249 = vmatprep.subr.mxu0 0.0
    %250 = vmatpush1.msra.mxu0 0.0
    %251 = vmatprep.subr.mxu0 0.0
    %252 = vmatpush1.msra.mxu0 0.0
    %253 = vmatprep.subr.mxu0 0.0
    %254 = vmatpush1.msra.mxu0 0.0
    %255 = vmatprep.subr.mxu0 0.0
    %256 = vmatpush1.msra.mxu0 0.0
    %257 = vmatprep.subr.mxu0 0.0
    %258 = vmatpush1.msra.mxu0 0.0
    %259 = vmatprep.subr.mxu0 0.0
    %260 = vmatpush1.msra.mxu0 0.0
    %261 = vmatprep.subr.mxu0 0.0
    %262 = vmatpush1.msra.mxu0 0.0
    %263 = vmatprep.subr.mxu0 0.0
    %264 = vmatpush1.msra.mxu0 %v31
    %265 = vmatprep.subr.mxu0 0.0
    %266 = vmatpush1.msra.mxu0 %v30
    %267 = vmatprep.subr.mxu0 0.0
    %268 = vmatpush2.msra.mxu0 0.0
    %269 = vmatprep.subr.mxu0 0.0
    %270 = vmatpush2.msra.mxu0 0.0
    %271 = vmatprep.subr.mxu0 0.0
    %272 = vmatpush2.msra.mxu0 0.0
    %273 = vmatprep.subr.mxu0 0.0
    %274 = vmatpush2.msra.mxu0 0.0
    %275 = vmatprep.subr.mxu0 0.0
    %276 = vmatpush2.msra.mxu0 0.0
    %277 = vmatprep.subr.mxu0 0.0
    %278 = vmatpush2.msra.mxu0 0.0
    %279 = vmatprep.subr.mxu0 0.0
    %280 = vmatpush2.msra.mxu0 0.0
    %281 = vmatprep.subr.mxu0 0.0
    %282 = vmatpush2.msra.mxu0 0.0
    %283 = vmatprep.subr.mxu0 0.0
    %284 = vmatpush2.msra.mxu0 0.0
    %285 = vmatprep.subr.mxu0 0.0
    %286 = vmatpush2.msra.mxu0 0.0
    %287 = vmatprep.subr.mxu0 0.0
    %288 = vmatpush2.msra.mxu0 0.0
    %289 = vmatprep.subr.mxu0 0.0
    %290 = vmatpush2.msra.mxu0 0.0
    %291 = vmatprep.subr.mxu0 0.0
    %292 = vmatpush2.msra.mxu0 0.0
    %293 = vmatprep.subr.mxu0 0.0
    %294 = vmatpush2.msra.mxu0 0.0
    %295 = vmatprep.subr.mxu0 0.0
    %296 = vmatpush2.msra.mxu0 0.0
    %297 = vmatprep.subr.mxu0 0.0
    %298 = vmatpush2.msra.mxu0 0.0
    %299 = vmatprep.mubr.f32.mxu0 0.0
    %300 = vmatmul.mubr.f32.gmra.mxu0 %v212
    %v301 = vpop.f32.mrf.mxu0
    %v302 = vadd.f32 %v209, %v301
    %v303 = vpop.f32.mrf.mxu0
    %304 = vmatprep.mubr.f32.mxu0 0.0
    %305 = vmatmul.mubr.f32.gmra.mxu0 %v215
    %v306 = vpop.f32.mrf.mxu0
    %v307 = vadd.f32 %v209, %v306
    %v308 = vpop.f32.mrf.mxu0
    %309 = vmatprep.mubr.f32.mxu0 0.0
    %310 = vmatmul.mubr.f32.gmra.mxu0 %v218
    %v311 = vpop.f32.mrf.mxu0
    %v312 = vadd.f32 %v209, %v311
    %v313 = vpop.f32.mrf.mxu0
    %314 = vmatprep.mubr.f32.mxu0 0.0
    %315 = vmatmul.mubr.f32.gmra.mxu0 %v221
    %v316 = vpop.f32.mrf.mxu0
    %v317 = vadd.f32 %v209, %v316
    %v318 = vpop.f32.mrf.mxu0
    %319 = vmatprep.mubr.f32.mxu0 0.0
    %320 = vmatmul.mubr.f32.gmra.mxu0 %v224
    %v321 = vpop.f32.mrf.mxu0
    %v322 = vadd.f32 %v209, %v321
    %v323 = vpop.f32.mrf.mxu0
    %324 = vmatprep.mubr.f32.mxu0 0.0
    %325 = vmatmul.mubr.f32.gmra.mxu0 %v227
    %v326 = vpop.f32.mrf.mxu0
    %v327 = vadd.f32 %v209, %v326
    %v328 = vpop.f32.mrf.mxu0
    %329 = vmatprep.mubr.f32.mxu0 0.0
    %330 = vmatmul.mubr.f32.gmra.mxu0 %v230
    %v331 = vpop.f32.mrf.mxu0
    %v332 = vadd.f32 %v209, %v331
    %v333 = vpop.f32.mrf.mxu0
    %334 = vmatprep.mubr.f32.mxu0 0.0
    %335 = vmatmul.mubr.f32.gmra.mxu0 %v233
    %v336 = vpop.f32.mrf.mxu0
    %v337 = vadd.f32 %v209, %v336
    %v338 = vpop.f32.mrf.mxu0
    %339 = vdwg.mxu0
    %341 = vset.pattern.permute.xlu0 0
    %342 = vperm.xlu0 %341, %v62
    %v343 = vpop.permute.xlu0 %342
    %346 = vset.pattern.permute.xlu0 0
    %347 = vperm.xlu0 %346, %v63
    %v348 = vpop.permute.xlu0 %347
    %351 = vset.pattern.permute.xlu0 0
    %352 = vperm.xlu0 %351, %v64
    %v353 = vpop.permute.xlu0 %352
    %v355 = vlaneseq
    %v356 = vshrl.u32 %v355, 7
    %v357 = vsub.s32 0, %v356
    %v358 = vrot.slane %v37, %v357
    %v359 = vmul.f32 %v104, %v358
    %v360 = vmul.f32 %v343, %v358
    %v361 = vmul.f32 %v348, %v358
    %v362 = vmul.f32 %v353, %v358
    %363 = vset.pattern.permute.xlu0 1
    %364 = vperm.xlu0 %363, %v62
    %v365 = vpop.permute.xlu0 %364
    %367 = vset.pattern.permute.xlu0 1
    %368 = vperm.xlu0 %367, %v63
    %v369 = vpop.permute.xlu0 %368
    %371 = vset.pattern.permute.xlu0 1
    %372 = vperm.xlu0 %371, %v64
    %v373 = vpop.permute.xlu0 %372
    %v375 = vlaneseq
    %v376 = vshrl.u32 %v375, 7
    %v377 = vsub.s32 1, %v376
    %v378 = vrot.slane %v37, %v377
    %v379 = vmul.f32 %v148, %v378
    %v380 = vmul.f32 %v365, %v378
    %v381 = vmul.f32 %v369, %v378
    %v382 = vmul.f32 %v373, %v378
    %v383 = vadd.f32 %v359, %v379
    %v384 = vadd.f32 %v360, %v380
    %v385 = vadd.f32 %v361, %v381
    %v386 = vadd.f32 %v362, %v382
    %v387 = vlaneseq
    %v388 = vshrl.u32 %v387, 7
    %v389 = vsub.s32 0, %v388
    %v390 = vrot.slane %v42, %v389
    %v391 = vadd.f32 %v383, %v390
    %v392 = vadd.f32 %v384, %v390
    %v393 = vadd.f32 %v385, %v390
    %v394 = vadd.f32 %v386, %v390
    %v395 = vsub.f32 %v62, %v61
    %v396 = vsub.f32 %v63, %v62
    %v397 = vsub.f32 %v64, %v63
    %v398 = vsub.f32 %v65, %v64
    %v399 = vlaneseq
    %v400 = vand.u32 %v399, 127
    %vm401 = vcmp.ge.s32.totalorder %v400, 64
    %vm402 = vcmp.lt.s32.totalorder %v400, 96
    %vm403 = vmand %vm401, %vm402
    %v404 = vsel %vm403, 1.0, 0.5
    %vm405 = vcmask 261120
    %v407 = vsel %vm405, 0.0, 0
    %409 = vmatprep.subr.mxu0 0.0
    %410 = vmatpush1.msra.mxu0 0.0
    %411 = vmatprep.subr.mxu0 0.0
    %412 = vmatpush1.msra.mxu0 0.0
    %413 = vmatprep.subr.mxu0 0.0
    %414 = vmatpush1.msra.mxu0 0.0
    %415 = vmatprep.subr.mxu0 0.0
    %416 = vmatpush1.msra.mxu0 0.0
    %417 = vmatprep.subr.mxu0 0.0
    %418 = vmatpush1.msra.mxu0 0.0
    %419 = vmatprep.subr.mxu0 0.0
    %420 = vmatpush1.msra.mxu0 0.0
    %421 = vmatprep.subr.mxu0 0.0
    %422 = vmatpush1.msra.mxu0 0.0
    %423 = vmatprep.subr.mxu0 0.0
    %424 = vmatpush1.msra.mxu0 0.0
    %425 = vmatprep.subr.mxu0 0.0
    %426 = vmatpush1.msra.mxu0 0.0
    %427 = vmatprep.subr.mxu0 0.0
    %428 = vmatpush1.msra.mxu0 0.0
    %429 = vmatprep.subr.mxu0 0.0
    %430 = vmatpush1.msra.mxu0 0.0
    %431 = vmatprep.subr.mxu0 0.0
    %432 = vmatpush1.msra.mxu0 0.0
    %433 = vmatprep.subr.mxu0 0.0
    %434 = vmatpush1.msra.mxu0 %v35
    %435 = vmatprep.subr.mxu0 0.0
    %436 = vmatpush1.msra.mxu0 %v34
    %437 = vmatprep.subr.mxu0 0.0
    %438 = vmatpush1.msra.mxu0 %v33
    %439 = vmatprep.subr.mxu0 0.0
    %440 = vmatpush1.msra.mxu0 %v32
    %441 = vmatprep.subr.mxu0 0.0
    %442 = vmatpush2.msra.mxu0 0.0
    %443 = vmatprep.subr.mxu0 0.0
    %444 = vmatpush2.msra.mxu0 0.0
    %445 = vmatprep.subr.mxu0 0.0
    %446 = vmatpush2.msra.mxu0 0.0
    %447 = vmatprep.subr.mxu0 0.0
    %448 = vmatpush2.msra.mxu0 0.0
    %449 = vmatprep.subr.mxu0 0.0
    %450 = vmatpush2.msra.mxu0 0.0
    %451 = vmatprep.subr.mxu0 0.0
    %452 = vmatpush2.msra.mxu0 0.0
    %453 = vmatprep.subr.mxu0 0.0
    %454 = vmatpush2.msra.mxu0 0.0
    %455 = vmatprep.subr.mxu0 0.0
    %456 = vmatpush2.msra.mxu0 0.0
    %457 = vmatprep.subr.mxu0 0.0
    %458 = vmatpush2.msra.mxu0 0.0
    %459 = vmatprep.subr.mxu0 0.0
    %460 = vmatpush2.msra.mxu0 0.0
    %461 = vmatprep.subr.mxu0 0.0
    %462 = vmatpush2.msra.mxu0 0.0
    %463 = vmatprep.subr.mxu0 0.0
    %464 = vmatpush2.msra.mxu0 0.0
    %465 = vmatprep.subr.mxu0 0.0
    %466 = vmatpush2.msra.mxu0 0.0
    %467 = vmatprep.subr.mxu0 0.0
    %468 = vmatpush2.msra.mxu0 0.0
    %469 = vmatprep.subr.mxu0 0.0
    %470 = vmatpush2.msra.mxu0 0.0
    %471 = vmatprep.subr.mxu0 0.0
    %472 = vmatpush2.msra.mxu0 0.0
    %473 = vmatprep.mubr.f32.mxu0 0.0
    %474 = vmatmul.mubr.f32.gmra.mxu0 %v407
    %v475 = vpop.f32.mrf.mxu0
    %v476 = vadd.f32 0.0, %v475
    %v477 = vpop.f32.mrf.mxu0
    %478 = vdwg.mxu0
    %v479 = vadd.f32 %v302, %v476
    %v480 = vmul.f32 %v479, %v404
    %v481 = vtanh.pop %v480
    %v482 = vmul.f32 %v481, 0.5
    %v483 = vadd.f32 %v482, 0.5
    %v484 = vsel %vm403, %v481, %v483
    %v485 = vmul.f32 %v484, 0.0
    %487 = vrot.lane.b32.xlu0 %v484, 64
    %v488 = vpop.permute.xlu0 %487
    %v490 = vmul.f32 %v484, %v488
    %492 = vrot.lane.b32.xlu0 %v490, 32
    %v493 = vpop.permute.xlu0 %492
    %v495 = vadd.f32 %v485, %v493
    %v496 = vtanh.pop %v495
    %498 = vrot.lane.b32.xlu0 %v496, 64
    %v499 = vpop.permute.xlu0 %498
    %v501 = vmul.f32 %v484, %v499
    %503 = vrot.lane.b32.xlu0 %v501, 32
    %v504 = vpop.permute.xlu0 %503
    %v505 = vsel %vm405, %v504, 0
    %507 = vmatprep.subr.mxu0 0.0
    %508 = vmatpush1.msra.mxu0 0.0
    %509 = vmatprep.subr.mxu0 0.0
    %510 = vmatpush1.msra.mxu0 0.0
    %511 = vmatprep.subr.mxu0 0.0
    %512 = vmatpush1.msra.mxu0 0.0
    %513 = vmatprep.subr.mxu0 0.0
    %514 = vmatpush1.msra.mxu0 0.0
    %515 = vmatprep.subr.mxu0 0.0
    %516 = vmatpush1.msra.mxu0 0.0
    %517 = vmatprep.subr.mxu0 0.0
    %518 = vmatpush1.msra.mxu0 0.0
    %519 = vmatprep.subr.mxu0 0.0
    %520 = vmatpush1.msra.mxu0 0.0
    %521 = vmatprep.subr.mxu0 0.0
    %522 = vmatpush1.msra.mxu0 0.0
    %523 = vmatprep.subr.mxu0 0.0
    %524 = vmatpush1.msra.mxu0 0.0
    %525 = vmatprep.subr.mxu0 0.0
    %526 = vmatpush1.msra.mxu0 0.0
    %527 = vmatprep.subr.mxu0 0.0
    %528 = vmatpush1.msra.mxu0 0.0
    %529 = vmatprep.subr.mxu0 0.0
    %530 = vmatpush1.msra.mxu0 0.0
    %531 = vmatprep.subr.mxu0 0.0
    %532 = vmatpush1.msra.mxu0 %v35
    %533 = vmatprep.subr.mxu0 0.0
    %534 = vmatpush1.msra.mxu0 %v34
    %535 = vmatprep.subr.mxu0 0.0
    %536 = vmatpush1.msra.mxu0 %v33
    %537 = vmatprep.subr.mxu0 0.0
    %538 = vmatpush1.msra.mxu0 %v32
    %539 = vmatprep.subr.mxu0 0.0
    %540 = vmatpush2.msra.mxu0 0.0
    %541 = vmatprep.subr.mxu0 0.0
    %542 = vmatpush2.msra.mxu0 0.0
    %543 = vmatprep.subr.mxu0 0.0
    %544 = vmatpush2.msra.mxu0 0.0
    %545 = vmatprep.subr.mxu0 0.0
    %546 = vmatpush2.msra.mxu0 0.0
    %547 = vmatprep.subr.mxu0 0.0
    %548 = vmatpush2.msra.mxu0 0.0
    %549 = vmatprep.subr.mxu0 0.0
    %550 = vmatpush2.msra.mxu0 0.0
    %551 = vmatprep.subr.mxu0 0.0
    %552 = vmatpush2.msra.mxu0 0.0
    %553 = vmatprep.subr.mxu0 0.0
    %554 = vmatpush2.msra.mxu0 0.0
    %555 = vmatprep.subr.mxu0 0.0
    %556 = vmatpush2.msra.mxu0 0.0
    %557 = vmatprep.subr.mxu0 0.0
    %558 = vmatpush2.msra.mxu0 0.0
    %559 = vmatprep.subr.mxu0 0.0
    %560 = vmatpush2.msra.mxu0 0.0
    %561 = vmatprep.subr.mxu0 0.0
    %562 = vmatpush2.msra.mxu0 0.0
    %563 = vmatprep.subr.mxu0 0.0
    %564 = vmatpush2.msra.mxu0 0.0
    %565 = vmatprep.subr.mxu0 0.0
    %566 = vmatpush2.msra.mxu0 0.0
    %567 = vmatprep.subr.mxu0 0.0
    %568 = vmatpush2.msra.mxu0 0.0
    %569 = vmatprep.subr.mxu0 0.0
    %570 = vmatpush2.msra.mxu0 0.0
    %571 = vmatprep.mubr.f32.mxu0 0.0
    %572 = vmatmul.mubr.f32.gmra.mxu0 %v505
    %v573 = vpop.f32.mrf.mxu0
    %v574 = vadd.f32 0.0, %v573
    %v575 = vpop.f32.mrf.mxu0
    %576 = vdwg.mxu0
    %v577 = vadd.f32 %v307, %v574
    %v578 = vmul.f32 %v577, %v404
    %v579 = vtanh.pop %v578
    %v580 = vmul.f32 %v579, 0.5
    %v581 = vadd.f32 %v580, 0.5
    %v582 = vsel %vm403, %v579, %v581
    %v583 = vmul.f32 %v582, %v495
    %585 = vrot.lane.b32.xlu0 %v582, 64
    %v586 = vpop.permute.xlu0 %585
    %v588 = vmul.f32 %v582, %v586
    %590 = vrot.lane.b32.xlu0 %v588, 32
    %v591 = vpop.permute.xlu0 %590
    %v593 = vadd.f32 %v583, %v591
    %v594 = vtanh.pop %v593
    %596 = vrot.lane.b32.xlu0 %v594, 64
    %v597 = vpop.permute.xlu0 %596
    %v599 = vmul.f32 %v582, %v597
    %601 = vrot.lane.b32.xlu0 %v599, 32
    %v602 = vpop.permute.xlu0 %601
    %v603 = vsel %vm405, %v602, 0
    %605 = vmatprep.subr.mxu0 0.0
    %606 = vmatpush1.msra.mxu0 0.0
    %607 = vmatprep.subr.mxu0 0.0
    %608 = vmatpush1.msra.mxu0 0.0
    %609 = vmatprep.subr.mxu0 0.0
    %610 = vmatpush1.msra.mxu0 0.0
    %611 = vmatprep.subr.mxu0 0.0
    %612 = vmatpush1.msra.mxu0 0.0
    %613 = vmatprep.subr.mxu0 0.0
    %614 = vmatpush1.msra.mxu0 0.0
    %615 = vmatprep.subr.mxu0 0.0
    %616 = vmatpush1.msra.mxu0 0.0
    %617 = vmatprep.subr.mxu0 0.0
    %618 = vmatpush1.msra.mxu0 0.0
    %619 = vmatprep.subr.mxu0 0.0
    %620 = vmatpush1.msra.mxu0 0.0
    %621 = vmatprep.subr.mxu0 0.0
    %622 = vmatpush1.msra.mxu0 0.0
    %623 = vmatprep.subr.mxu0 0.0
    %624 = vmatpush1.msra.mxu0 0.0
    %625 = vmatprep.subr.mxu0 0.0
    %626 = vmatpush1.msra.mxu0 0.0
    %627 = vmatprep.subr.mxu0 0.0
    %628 = vmatpush1.msra.mxu0 0.0
    %629 = vmatprep.subr.mxu0 0.0
    %630 = vmatpush1.msra.mxu0 %v35
    %631 = vmatprep.subr.mxu0 0.0
    %632 = vmatpush1.msra.mxu0 %v34
    %633 = vmatprep.subr.mxu0 0.0
    %634 = vmatpush1.msra.mxu0 %v33
    %635 = vmatprep.subr.mxu0 0.0
    %636 = vmatpush1.msra.mxu0 %v32
    %637 = vmatprep.subr.mxu0 0.0
    %638 = vmatpush2.msra.mxu0 0.0
    %639 = vmatprep.subr.mxu0 0.0
    %640 = vmatpush2.msra.mxu0 0.0
    %641 = vmatprep.subr.mxu0 0.0
    %642 = vmatpush2.msra.mxu0 0.0
    %643 = vmatprep.subr.mxu0 0.0
    %644 = vmatpush2.msra.mxu0 0.0
    %645 = vmatprep.subr.mxu0 0.0
    %646 = vmatpush2.msra.mxu0 0.0
    %647 = vmatprep.subr.mxu0 0.0
    %648 = vmatpush2.msra.mxu0 0.0
    %649 = vmatprep.subr.mxu0 0.0
    %650 = vmatpush2.msra.mxu0 0.0
    %651 = vmatprep.subr.mxu0 0.0
    %652 = vmatpush2.msra.mxu0 0.0
    %653 = vmatprep.subr.mxu0 0.0
    %654 = vmatpush2.msra.mxu0 0.0
    %655 = vmatprep.subr.mxu0 0.0
    %656 = vmatpush2.msra.mxu0 0.0
    %657 = vmatprep.subr.mxu0 0.0
    %658 = vmatpush2.msra.mxu0 0.0
    %659 = vmatprep.subr.mxu0 0.0
    %660 = vmatpush2.msra.mxu0 0.0
    %661 = vmatprep.subr.mxu0 0.0
    %662 = vmatpush2.msra.mxu0 0.0
    %663 = vmatprep.subr.mxu0 0.0
    %664 = vmatpush2.msra.mxu0 0.0
    %665 = vmatprep.subr.mxu0 0.0
    %666 = vmatpush2.msra.mxu0 0.0
    %667 = vmatprep.subr.mxu0 0.0
    %668 = vmatpush2.msra.mxu0 0.0
    %669 = vmatprep.mubr.f32.mxu0 0.0
    %670 = vmatmul.mubr.f32.gmra.mxu0 %v603
    %v671 = vpop.f32.mrf.mxu0
    %v672 = vadd.f32 0.0, %v671
    %v673 = vpop.f32.mrf.mxu0
    %674 = vdwg.mxu0
    %v675 = vadd.f32 %v312, %v672
    %v676 = vmul.f32 %v675, %v404
    %v677 = vtanh.pop %v676
    %v678 = vmul.f32 %v677, 0.5
    %v679 = vadd.f32 %v678, 0.5
    %v680 = vsel %vm403, %v677, %v679
    %v681 = vmul.f32 %v680, %v593
    %683 = vrot.lane.b32.xlu0 %v680, 64
    %v684 = vpop.permute.xlu0 %683
    %v686 = vmul.f32 %v680, %v684
    %688 = vrot.lane.b32.xlu0 %v686, 32
    %v689 = vpop.permute.xlu0 %688
    %v691 = vadd.f32 %v681, %v689
    %v692 = vtanh.pop %v691
    %694 = vrot.lane.b32.xlu0 %v692, 64
    %v695 = vpop.permute.xlu0 %694
    %v697 = vmul.f32 %v680, %v695
    %699 = vrot.lane.b32.xlu0 %v697, 32
    %v700 = vpop.permute.xlu0 %699
    %v701 = vsel %vm405, %v700, 0
    %703 = vmatprep.subr.mxu0 0.0
    %704 = vmatpush1.msra.mxu0 0.0
    %705 = vmatprep.subr.mxu0 0.0
    %706 = vmatpush1.msra.mxu0 0.0
    %707 = vmatprep.subr.mxu0 0.0
    %708 = vmatpush1.msra.mxu0 0.0
    %709 = vmatprep.subr.mxu0 0.0
    %710 = vmatpush1.msra.mxu0 0.0
    %711 = vmatprep.subr.mxu0 0.0
    %712 = vmatpush1.msra.mxu0 0.0
    %713 = vmatprep.subr.mxu0 0.0
    %714 = vmatpush1.msra.mxu0 0.0
    %715 = vmatprep.subr.mxu0 0.0
    %716 = vmatpush1.msra.mxu0 0.0
    %717 = vmatprep.subr.mxu0 0.0
    %718 = vmatpush1.msra.mxu0 0.0
    %719 = vmatprep.subr.mxu0 0.0
    %720 = vmatpush1.msra.mxu0 0.0
    %721 = vmatprep.subr.mxu0 0.0
    %722 = vmatpush1.msra.mxu0 0.0
    %723 = vmatprep.subr.mxu0 0.0
    %724 = vmatpush1.msra.mxu0 0.0
    %725 = vmatprep.subr.mxu0 0.0
    %726 = vmatpush1.msra.mxu0 0.0
    %727 = vmatprep.subr.mxu0 0.0
    %728 = vmatpush1.msra.mxu0 %v35
    %729 = vmatprep.subr.mxu0 0.0
    %730 = vmatpush1.msra.mxu0 %v34
    %731 = vmatprep.subr.mxu0 0.0
    %732 = vmatpush1.msra.mxu0 %v33
    %733 = vmatprep.subr.mxu0 0.0
    %734 = vmatpush1.msra.mxu0 %v32
    %735 = vmatprep.subr.mxu0 0.0
    %736 = vmatpush2.msra.mxu0 0.0
    %737 = vmatprep.subr.mxu0 0.0
    %738 = vmatpush2.msra.mxu0 0.0
    %739 = vmatprep.subr.mxu0 0.0
    %740 = vmatpush2.msra.mxu0 0.0
    %741 = vmatprep.subr.mxu0 0.0
    %742 = vmatpush2.msra.mxu0 0.0
    %743 = vmatprep.subr.mxu0 0.0
    %744 = vmatpush2.msra.mxu0 0.0
    %745 = vmatprep.subr.mxu0 0.0
    %746 = vmatpush2.msra.mxu0 0.0
    %747 = vmatprep.subr.mxu0 0.0
    %748 = vmatpush2.msra.mxu0 0.0
    %749 = vmatprep.subr.mxu0 0.0
    %750 = vmatpush2.msra.mxu0 0.0
    %751 = vmatprep.subr.mxu0 0.0
    %752 = vmatpush2.msra.mxu0 0.0
    %753 = vmatprep.subr.mxu0 0.0
    %754 = vmatpush2.msra.mxu0 0.0
    %755 = vmatprep.subr.mxu0 0.0
    %756 = vmatpush2.msra.mxu0 0.0
    %757 = vmatprep.subr.mxu0 0.0
    %758 = vmatpush2.msra.mxu0 0.0
    %759 = vmatprep.subr.mxu0 0.0
    %760 = vmatpush2.msra.mxu0 0.0
    %761 = vmatprep.subr.mxu0 0.0
    %762 = vmatpush2.msra.mxu0 0.0
    %763 = vmatprep.subr.mxu0 0.0
    %764 = vmatpush2.msra.mxu0 0.0
    %765 = vmatprep.subr.mxu0 0.0
    %766 = vmatpush2.msra.mxu0 0.0
    %767 = vmatprep.mubr.f32.mxu0 0.0
    %768 = vmatmul.mubr.f32.gmra.mxu0 %v701
    %v769 = vpop.f32.mrf.mxu0
    %v770 = vadd.f32 0.0, %v769
    %v771 = vpop.f32.mrf.mxu0
    %772 = vdwg.mxu0
    %v773 = vadd.f32 %v317, %v770
    %v774 = vmul.f32 %v773, %v404
    %v775 = vtanh.pop %v774
    %v776 = vmul.f32 %v775, 0.5
    %v777 = vadd.f32 %v776, 0.5
    %v778 = vsel %vm403, %v775, %v777
    %v779 = vmul.f32 %v778, %v691
    %781 = vrot.lane.b32.xlu0 %v778, 64
    %v782 = vpop.permute.xlu0 %781
    %v784 = vmul.f32 %v778, %v782
    %786 = vrot.lane.b32.xlu0 %v784, 32
    %v787 = vpop.permute.xlu0 %786
    %v789 = vadd.f32 %v779, %v787
    %v790 = vtanh.pop %v789
    %792 = vrot.lane.b32.xlu0 %v790, 64
    %v793 = vpop.permute.xlu0 %792
    %v795 = vmul.f32 %v778, %v793
    %797 = vrot.lane.b32.xlu0 %v795, 32
    %v798 = vpop.permute.xlu0 %797
    %v799 = vsel %vm405, %v798, 0
    %801 = vmatprep.subr.mxu0 0.0
    %802 = vmatpush1.msra.mxu0 0.0
    %803 = vmatprep.subr.mxu0 0.0
    %804 = vmatpush1.msra.mxu0 0.0
    %805 = vmatprep.subr.mxu0 0.0
    %806 = vmatpush1.msra.mxu0 0.0
    %807 = vmatprep.subr.mxu0 0.0
    %808 = vmatpush1.msra.mxu0 0.0
    %809 = vmatprep.subr.mxu0 0.0
    %810 = vmatpush1.msra.mxu0 0.0
    %811 = vmatprep.subr.mxu0 0.0
    %812 = vmatpush1.msra.mxu0 0.0
    %813 = vmatprep.subr.mxu0 0.0
    %814 = vmatpush1.msra.mxu0 0.0
    %815 = vmatprep.subr.mxu0 0.0
    %816 = vmatpush1.msra.mxu0 0.0
    %817 = vmatprep.subr.mxu0 0.0
    %818 = vmatpush1.msra.mxu0 0.0
    %819 = vmatprep.subr.mxu0 0.0
    %820 = vmatpush1.msra.mxu0 0.0
    %821 = vmatprep.subr.mxu0 0.0
    %822 = vmatpush1.msra.mxu0 0.0
    %823 = vmatprep.subr.mxu0 0.0
    %824 = vmatpush1.msra.mxu0 0.0
    %825 = vmatprep.subr.mxu0 0.0
    %826 = vmatpush1.msra.mxu0 %v35
    %827 = vmatprep.subr.mxu0 0.0
    %828 = vmatpush1.msra.mxu0 %v34
    %829 = vmatprep.subr.mxu0 0.0
    %830 = vmatpush1.msra.mxu0 %v33
    %831 = vmatprep.subr.mxu0 0.0
    %832 = vmatpush1.msra.mxu0 %v32
    %833 = vmatprep.subr.mxu0 0.0
    %834 = vmatpush2.msra.mxu0 0.0
    %835 = vmatprep.subr.mxu0 0.0
    %836 = vmatpush2.msra.mxu0 0.0
    %837 = vmatprep.subr.mxu0 0.0
    %838 = vmatpush2.msra.mxu0 0.0
    %839 = vmatprep.subr.mxu0 0.0
    %840 = vmatpush2.msra.mxu0 0.0
    %841 = vmatprep.subr.mxu0 0.0
    %842 = vmatpush2.msra.mxu0 0.0
    %843 = vmatprep.subr.mxu0 0.0
    %844 = vmatpush2.msra.mxu0 0.0
    %845 = vmatprep.subr.mxu0 0.0
    %846 = vmatpush2.msra.mxu0 0.0
    %847 = vmatprep.subr.mxu0 0.0
    %848 = vmatpush2.msra.mxu0 0.0
    %849 = vmatprep.subr.mxu0 0.0
    %850 = vmatpush2.msra.mxu0 0.0
    %851 = vmatprep.subr.mxu0 0.0
    %852 = vmatpush2.msra.mxu0 0.0
    %853 = vmatprep.subr.mxu0 0.0
    %854 = vmatpush2.msra.mxu0 0.0
    %855 = vmatprep.subr.mxu0 0.0
    %856 = vmatpush2.msra.mxu0 0.0
    %857 = vmatprep.subr.mxu0 0.0
    %858 = vmatpush2.msra.mxu0 0.0
    %859 = vmatprep.subr.mxu0 0.0
    %860 = vmatpush2.msra.mxu0 0.0
    %861 = vmatprep.subr.mxu0 0.0
    %862 = vmatpush2.msra.mxu0 0.0
    %863 = vmatprep.subr.mxu0 0.0
    %864 = vmatpush2.msra.mxu0 0.0
    %865 = vmatprep.mubr.f32.mxu0 0.0
    %866 = vmatmul.mubr.f32.gmra.mxu0 %v799
    %v867 = vpop.f32.mrf.mxu0
    %v868 = vadd.f32 0.0, %v867
    %v869 = vpop.f32.mrf.mxu0
    %870 = vdwg.mxu0
    %v871 = vadd.f32 %v322, %v868
    %v872 = vmul.f32 %v871, %v404
    %v873 = vtanh.pop %v872
    %v874 = vmul.f32 %v873, 0.5
    %v875 = vadd.f32 %v874, 0.5
    %v876 = vsel %vm403, %v873, %v875
    %v877 = vmul.f32 %v876, %v789
    %879 = vrot.lane.b32.xlu0 %v876, 64
    %v880 = vpop.permute.xlu0 %879
    %v882 = vmul.f32 %v876, %v880
    %884 = vrot.lane.b32.xlu0 %v882, 32
    %v885 = vpop.permute.xlu0 %884
    %v887 = vadd.f32 %v877, %v885
    %v888 = vtanh.pop %v887
    %890 = vrot.lane.b32.xlu0 %v888, 64
    %v891 = vpop.permute.xlu0 %890
    %v893 = vmul.f32 %v876, %v891
    %895 = vrot.lane.b32.xlu0 %v893, 32
    %v896 = vpop.permute.xlu0 %895
    %v897 = vsel %vm405, %v896, 0
    %899 = vmatprep.subr.mxu0 0.0
    %900 = vmatpush1.msra.mxu0 0.0
    %901 = vmatprep.subr.mxu0 0.0
    %902 = vmatpush1.msra.mxu0 0.0
    %903 = vmatprep.subr.mxu0 0.0
    %904 = vmatpush1.msra.mxu0 0.0
    %905 = vmatprep.subr.mxu0 0.0
    %906 = vmatpush1.msra.mxu0 0.0
    %907 = vmatprep.subr.mxu0 0.0
    %908 = vmatpush1.msra.mxu0 0.0
    %909 = vmatprep.subr.mxu0 0.0
    %910 = vmatpush1.msra.mxu0 0.0
    %911 = vmatprep.subr.mxu0 0.0
    %912 = vmatpush1.msra.mxu0 0.0
    %913 = vmatprep.subr.mxu0 0.0
    %914 = vmatpush1.msra.mxu0 0.0
    %915 = vmatprep.subr.mxu0 0.0
    %916 = vmatpush1.msra.mxu0 0.0
    %917 = vmatprep.subr.mxu0 0.0
    %918 = vmatpush1.msra.mxu0 0.0
    %919 = vmatprep.subr.mxu0 0.0
    %920 = vmatpush1.msra.mxu0 0.0
    %921 = vmatprep.subr.mxu0 0.0
    %922 = vmatpush1.msra.mxu0 0.0
    %923 = vmatprep.subr.mxu0 0.0
    %924 = vmatpush1.msra.mxu0 %v35
    %925 = vmatprep.subr.mxu0 0.0
    %926 = vmatpush1.msra.mxu0 %v34
    %927 = vmatprep.subr.mxu0 0.0
    %928 = vmatpush1.msra.mxu0 %v33
    %929 = vmatprep.subr.mxu0 0.0
    %930 = vmatpush1.msra.mxu0 %v32
    %931 = vmatprep.subr.mxu0 0.0
    %932 = vmatpush2.msra.mxu0 0.0
    %933 = vmatprep.subr.mxu0 0.0
    %934 = vmatpush2.msra.mxu0 0.0
    %935 = vmatprep.subr.mxu0 0.0
    %936 = vmatpush2.msra.mxu0 0.0
    %937 = vmatprep.subr.mxu0 0.0
    %938 = vmatpush2.msra.mxu0 0.0
    %939 = vmatprep.subr.mxu0 0.0
    %940 = vmatpush2.msra.mxu0 0.0
    %941 = vmatprep.subr.mxu0 0.0
    %942 = vmatpush2.msra.mxu0 0.0
    %943 = vmatprep.subr.mxu0 0.0
    %944 = vmatpush2.msra.mxu0 0.0
    %945 = vmatprep.subr.mxu0 0.0
    %946 = vmatpush2.msra.mxu0 0.0
    %947 = vmatprep.subr.mxu0 0.0
    %948 = vmatpush2.msra.mxu0 0.0
    %949 = vmatprep.subr.mxu0 0.0
    %950 = vmatpush2.msra.mxu0 0.0
    %951 = vmatprep.subr.mxu0 0.0
    %952 = vmatpush2.msra.mxu0 0.0
    %953 = vmatprep.subr.mxu0 0.0
    %954 = vmatpush2.msra.mxu0 0.0
    %955 = vmatprep.subr.mxu0 0.0
    %956 = vmatpush2.msra.mxu0 0.0
    %957 = vmatprep.subr.mxu0 0.0
    %958 = vmatpush2.msra.mxu0 0.0
    %959 = vmatprep.subr.mxu0 0.0
    %960 = vmatpush2.msra.mxu0 0.0
    %961 = vmatprep.subr.mxu0 0.0
    %962 = vmatpush2.msra.mxu0 0.0
    %963 = vmatprep.mubr.f32.mxu0 0.0
    %964 = vmatmul.mubr.f32.gmra.mxu0 %v897
    %v965 = vpop.f32.mrf.mxu0
    %v966 = vadd.f32 0.0, %v965
    %v967 = vpop.f32.mrf.mxu0
    %968 = vdwg.mxu0
    %v969 = vadd.f32 %v327, %v966
    %v970 = vmul.f32 %v969, %v404
    %v971 = vtanh.pop %v970
    %v972 = vmul.f32 %v971, 0.5
    %v973 = vadd.f32 %v972, 0.5
    %v974 = vsel %vm403, %v971, %v973
    %v975 = vmul.f32 %v974, %v887
    %977 = vrot.lane.b32.xlu0 %v974, 64
    %v978 = vpop.permute.xlu0 %977
    %v980 = vmul.f32 %v974, %v978
    %982 = vrot.lane.b32.xlu0 %v980, 32
    %v983 = vpop.permute.xlu0 %982
    %v985 = vadd.f32 %v975, %v983
    %v986 = vtanh.pop %v985
    %988 = vrot.lane.b32.xlu0 %v986, 64
    %v989 = vpop.permute.xlu0 %988
    %v991 = vmul.f32 %v974, %v989
    %993 = vrot.lane.b32.xlu0 %v991, 32
    %v994 = vpop.permute.xlu0 %993
    %v995 = vsel %vm405, %v994, 0
    %997 = vmatprep.subr.mxu0 0.0
    %998 = vmatpush1.msra.mxu0 0.0
    %999 = vmatprep.subr.mxu0 0.0
    %1000 = vmatpush1.msra.mxu0 0.0
    %1001 = vmatprep.subr.mxu0 0.0
    %1002 = vmatpush1.msra.mxu0 0.0
    %1003 = vmatprep.subr.mxu0 0.0
    %1004 = vmatpush1.msra.mxu0 0.0
    %1005 = vmatprep.subr.mxu0 0.0
    %1006 = vmatpush1.msra.mxu0 0.0
    %1007 = vmatprep.subr.mxu0 0.0
    %1008 = vmatpush1.msra.mxu0 0.0
    %1009 = vmatprep.subr.mxu0 0.0
    %1010 = vmatpush1.msra.mxu0 0.0
    %1011 = vmatprep.subr.mxu0 0.0
    %1012 = vmatpush1.msra.mxu0 0.0
    %1013 = vmatprep.subr.mxu0 0.0
    %1014 = vmatpush1.msra.mxu0 0.0
    %1015 = vmatprep.subr.mxu0 0.0
    %1016 = vmatpush1.msra.mxu0 0.0
    %1017 = vmatprep.subr.mxu0 0.0
    %1018 = vmatpush1.msra.mxu0 0.0
    %1019 = vmatprep.subr.mxu0 0.0
    %1020 = vmatpush1.msra.mxu0 0.0
    %1021 = vmatprep.subr.mxu0 0.0
    %1022 = vmatpush1.msra.mxu0 %v35
    %1023 = vmatprep.subr.mxu0 0.0
    %1024 = vmatpush1.msra.mxu0 %v34
    %1025 = vmatprep.subr.mxu0 0.0
    %1026 = vmatpush1.msra.mxu0 %v33
    %1027 = vmatprep.subr.mxu0 0.0
    %1028 = vmatpush1.msra.mxu0 %v32
    %1029 = vmatprep.subr.mxu0 0.0
    %1030 = vmatpush2.msra.mxu0 0.0
    %1031 = vmatprep.subr.mxu0 0.0
    %1032 = vmatpush2.msra.mxu0 0.0
    %1033 = vmatprep.subr.mxu0 0.0
    %1034 = vmatpush2.msra.mxu0 0.0
    %1035 = vmatprep.subr.mxu0 0.0
    %1036 = vmatpush2.msra.mxu0 0.0
    %1037 = vmatprep.subr.mxu0 0.0
    %1038 = vmatpush2.msra.mxu0 0.0
    %1039 = vmatprep.subr.mxu0 0.0
    %1040 = vmatpush2.msra.mxu0 0.0
    %1041 = vmatprep.subr.mxu0 0.0
    %1042 = vmatpush2.msra.mxu0 0.0
    %1043 = vmatprep.subr.mxu0 0.0
    %1044 = vmatpush2.msra.mxu0 0.0
    %1045 = vmatprep.subr.mxu0 0.0
    %1046 = vmatpush2.msra.mxu0 0.0
    %1047 = vmatprep.subr.mxu0 0.0
    %1048 = vmatpush2.msra.mxu0 0.0
    %1049 = vmatprep.subr.mxu0 0.0
    %1050 = vmatpush2.msra.mxu0 0.0
    %1051 = vmatprep.subr.mxu0 0.0
    %1052 = vmatpush2.msra.mxu0 0.0
    %1053 = vmatprep.subr.mxu0 0.0
    %1054 = vmatpush2.msra.mxu0 0.0
    %1055 = vmatprep.subr.mxu0 0.0
    %1056 = vmatpush2.msra.mxu0 0.0
    %1057 = vmatprep.subr.mxu0 0.0
    %1058 = vmatpush2.msra.mxu0 0.0
    %1059 = vmatprep.subr.mxu0 0.0
    %1060 = vmatpush2.msra.mxu0 0.0
    %1061 = vmatprep.mubr.f32.mxu0 0.0
    %1062 = vmatmul.mubr.f32.gmra.mxu0 %v995
    %v1063 = vpop.f32.mrf.mxu0
    %v1064 = vadd.f32 0.0, %v1063
    %v1065 = vpop.f32.mrf.mxu0
    %1066 = vdwg.mxu0
    %v1067 = vadd.f32 %v332, %v1064
    %v1068 = vmul.f32 %v1067, %v404
    %v1069 = vtanh.pop %v1068
    %v1070 = vmul.f32 %v1069, 0.5
    %v1071 = vadd.f32 %v1070, 0.5
    %v1072 = vsel %vm403, %v1069, %v1071
    %v1073 = vmul.f32 %v1072, %v985
    %1075 = vrot.lane.b32.xlu0 %v1072, 64
    %v1076 = vpop.permute.xlu0 %1075
    %v1078 = vmul.f32 %v1072, %v1076
    %1080 = vrot.lane.b32.xlu0 %v1078, 32
    %v1081 = vpop.permute.xlu0 %1080
    %v1083 = vadd.f32 %v1073, %v1081
    %v1084 = vtanh.pop %v1083
    %1086 = vrot.lane.b32.xlu0 %v1084, 64
    %v1087 = vpop.permute.xlu0 %1086
    %v1089 = vmul.f32 %v1072, %v1087
    %1091 = vrot.lane.b32.xlu0 %v1089, 32
    %v1092 = vpop.permute.xlu0 %1091
    %v1093 = vsel %vm405, %v1092, 0
    %1095 = vmatprep.subr.mxu0 0.0
    %1096 = vmatpush1.msra.mxu0 0.0
    %1097 = vmatprep.subr.mxu0 0.0
    %1098 = vmatpush1.msra.mxu0 0.0
    %1099 = vmatprep.subr.mxu0 0.0
    %1100 = vmatpush1.msra.mxu0 0.0
    %1101 = vmatprep.subr.mxu0 0.0
    %1102 = vmatpush1.msra.mxu0 0.0
    %1103 = vmatprep.subr.mxu0 0.0
    %1104 = vmatpush1.msra.mxu0 0.0
    %1105 = vmatprep.subr.mxu0 0.0
    %1106 = vmatpush1.msra.mxu0 0.0
    %1107 = vmatprep.subr.mxu0 0.0
    %1108 = vmatpush1.msra.mxu0 0.0
    %1109 = vmatprep.subr.mxu0 0.0
    %1110 = vmatpush1.msra.mxu0 0.0
    %1111 = vmatprep.subr.mxu0 0.0
    %1112 = vmatpush1.msra.mxu0 0.0
    %1113 = vmatprep.subr.mxu0 0.0
    %1114 = vmatpush1.msra.mxu0 0.0
    %1115 = vmatprep.subr.mxu0 0.0
    %1116 = vmatpush1.msra.mxu0 0.0
    %1117 = vmatprep.subr.mxu0 0.0
    %1118 = vmatpush1.msra.mxu0 0.0
    %1119 = vmatprep.subr.mxu0 0.0
    %1120 = vmatpush1.msra.mxu0 %v35
    %1121 = vmatprep.subr.mxu0 0.0
    %1122 = vmatpush1.msra.mxu0 %v34
    %1123 = vmatprep.subr.mxu0 0.0
    %1124 = vmatpush1.msra.mxu0 %v33
    %1125 = vmatprep.subr.mxu0 0.0
    %1126 = vmatpush1.msra.mxu0 %v32
    %1127 = vmatprep.subr.mxu0 0.0
    %1128 = vmatpush2.msra.mxu0 0.0
    %1129 = vmatprep.subr.mxu0 0.0
    %1130 = vmatpush2.msra.mxu0 0.0
    %1131 = vmatprep.subr.mxu0 0.0
    %1132 = vmatpush2.msra.mxu0 0.0
    %1133 = vmatprep.subr.mxu0 0.0
    %1134 = vmatpush2.msra.mxu0 0.0
    %1135 = vmatprep.subr.mxu0 0.0
    %1136 = vmatpush2.msra.mxu0 0.0
    %1137 = vmatprep.subr.mxu0 0.0
    %1138 = vmatpush2.msra.mxu0 0.0
    %1139 = vmatprep.subr.mxu0 0.0
    %1140 = vmatpush2.msra.mxu0 0.0
    %1141 = vmatprep.subr.mxu0 0.0
    %1142 = vmatpush2.msra.mxu0 0.0
    %1143 = vmatprep.subr.mxu0 0.0
    %1144 = vmatpush2.msra.mxu0 0.0
    %1145 = vmatprep.subr.mxu0 0.0
    %1146 = vmatpush2.msra.mxu0 0.0
    %1147 = vmatprep.subr.mxu0 0.0
    %1148 = vmatpush2.msra.mxu0 0.0
    %1149 = vmatprep.subr.mxu0 0.0
    %1150 = vmatpush2.msra.mxu0 0.0
    %1151 = vmatprep.subr.mxu0 0.0
    %1152 = vmatpush2.msra.mxu0 0.0
    %1153 = vmatprep.subr.mxu0 0.0
    %1154 = vmatpush2.msra.mxu0 0.0
    %1155 = vmatprep.subr.mxu0 0.0
    %1156 = vmatpush2.msra.mxu0 0.0
    %1157 = vmatprep.subr.mxu0 0.0
    %1158 = vmatpush2.msra.mxu0 0.0
    %1159 = vmatprep.mubr.f32.mxu0 0.0
    %1160 = vmatmul.mubr.f32.gmra.mxu0 %v1093
    %v1161 = vpop.f32.mrf.mxu0
    %v1162 = vadd.f32 0.0, %v1161
    %v1163 = vpop.f32.mrf.mxu0
    %1164 = vdwg.mxu0
    %v1165 = vadd.f32 %v337, %v1162
    %v1166 = vmul.f32 %v1165, %v404
    %v1167 = vtanh.pop %v1166
    %v1168 = vmul.f32 %v1167, 0.5
    %v1169 = vadd.f32 %v1168, 0.5
    %v1170 = vsel %vm403, %v1167, %v1169
    %v1171 = vmul.f32 %v1170, %v1083
    %1173 = vrot.lane.b32.xlu0 %v1170, 64
    %v1174 = vpop.permute.xlu0 %1173
    %v1176 = vmul.f32 %v1170, %v1174
    %1178 = vrot.lane.b32.xlu0 %v1176, 32
    %v1179 = vpop.permute.xlu0 %1178
    %v1181 = vadd.f32 %v1171, %v1179
    %v1182 = vtanh.pop %v1181
    %1184 = vrot.lane.b32.xlu0 %v1182, 64
    %v1185 = vpop.permute.xlu0 %1184
    %v1187 = vmul.f32 %v1170, %v1185
    %v1188 = vlaneseq
    %v1189 = vshrl.u32 %v1188, 7
    %v1190 = vsub.s32 0, %v1189
    %v1191 = vrot.slane %v43, %v1190
    %1193 = vrot.lane.b32.xlu0 %v1187, 32
    %v1194 = vpop.permute.xlu0 %1193
    %v1195 = vsel %vm405, %v1194, 0
    %1197 = vmatprep.subr.mxu0 0.0
    %1198 = vmatpush1.msra.mxu0 0.0
    %1199 = vmatprep.subr.mxu0 0.0
    %1200 = vmatpush1.msra.mxu0 0.0
    %1201 = vmatprep.subr.mxu0 0.0
    %1202 = vmatpush1.msra.mxu0 0.0
    %1203 = vmatprep.subr.mxu0 0.0
    %1204 = vmatpush1.msra.mxu0 0.0
    %1205 = vmatprep.subr.mxu0 0.0
    %1206 = vmatpush1.msra.mxu0 0.0
    %1207 = vmatprep.subr.mxu0 0.0
    %1208 = vmatpush1.msra.mxu0 0.0
    %1209 = vmatprep.subr.mxu0 0.0
    %1210 = vmatpush1.msra.mxu0 0.0
    %1211 = vmatprep.subr.mxu0 0.0
    %1212 = vmatpush1.msra.mxu0 0.0
    %1213 = vmatprep.subr.mxu0 0.0
    %1214 = vmatpush1.msra.mxu0 0.0
    %1215 = vmatprep.subr.mxu0 0.0
    %1216 = vmatpush1.msra.mxu0 0.0
    %1217 = vmatprep.subr.mxu0 0.0
    %1218 = vmatpush1.msra.mxu0 0.0
    %1219 = vmatprep.subr.mxu0 0.0
    %1220 = vmatpush1.msra.mxu0 0.0
    %1221 = vmatprep.subr.mxu0 0.0
    %1222 = vmatpush1.msra.mxu0 %v41
    %1223 = vmatprep.subr.mxu0 0.0
    %1224 = vmatpush1.msra.mxu0 %v40
    %1225 = vmatprep.subr.mxu0 0.0
    %1226 = vmatpush1.msra.mxu0 %v39
    %1227 = vmatprep.subr.mxu0 0.0
    %1228 = vmatpush1.msra.mxu0 %v38
    %1229 = vmatprep.subr.mxu0 0.0
    %1230 = vmatpush2.msra.mxu0 0.0
    %1231 = vmatprep.subr.mxu0 0.0
    %1232 = vmatpush2.msra.mxu0 0.0
    %1233 = vmatprep.subr.mxu0 0.0
    %1234 = vmatpush2.msra.mxu0 0.0
    %1235 = vmatprep.subr.mxu0 0.0
    %1236 = vmatpush2.msra.mxu0 0.0
    %1237 = vmatprep.subr.mxu0 0.0
    %1238 = vmatpush2.msra.mxu0 0.0
    %1239 = vmatprep.subr.mxu0 0.0
    %1240 = vmatpush2.msra.mxu0 0.0
    %1241 = vmatprep.subr.mxu0 0.0
    %1242 = vmatpush2.msra.mxu0 0.0
    %1243 = vmatprep.subr.mxu0 0.0
    %1244 = vmatpush2.msra.mxu0 0.0
    %1245 = vmatprep.subr.mxu0 0.0
    %1246 = vmatpush2.msra.mxu0 0.0
    %1247 = vmatprep.subr.mxu0 0.0
    %1248 = vmatpush2.msra.mxu0 0.0
    %1249 = vmatprep.subr.mxu0 0.0
    %1250 = vmatpush2.msra.mxu0 0.0
    %1251 = vmatprep.subr.mxu0 0.0
    %1252 = vmatpush2.msra.mxu0 0.0
    %1253 = vmatprep.subr.mxu0 0.0
    %1254 = vmatpush2.msra.mxu0 0.0
    %1255 = vmatprep.subr.mxu0 0.0
    %1256 = vmatpush2.msra.mxu0 0.0
    %1257 = vmatprep.subr.mxu0 0.0
    %1258 = vmatpush2.msra.mxu0 0.0
    %1259 = vmatprep.subr.mxu0 0.0
    %1260 = vmatpush2.msra.mxu0 0.0
    %1261 = vmatprep.mubr.f32.mxu0 0.0
    %1262 = vmatmul.mubr.f32.gmra.mxu0 %v1195
    %v1263 = vpop.f32.mrf.mxu0
    %v1264 = vadd.f32 %v1191, %v1263
    %v1265 = vpop.f32.mrf.mxu0
    %1266 = vdwg.mxu0
    %v1267 = vadd.f32 %v391, %v1264
    %v1268 = vmul.f32 %v1267, 0.5
    %v1269 = vtanh.pop %v1268
    %v1270 = vadd.f32 %v1269, 1.0
    %v1271 = vmul.f32 %v1270, 0.5
    %1273 = vrot.lane.b32.xlu0 %v1264, 64
    %v1274 = vpop.permute.xlu0 %1273
    %v1276 = vmul.f32 %v1271, %v1274
    %1278 = vrot.lane.b32.xlu0 %v1276, 64
    %v1279 = vpop.permute.xlu0 %1278
    %v1281 = vadd.f32 %v391, %v1279
    %v1282 = vtanh.pop %v1281
    %v1283 = vsub.f32 1.0, %v1271
    %1285 = vrot.lane.b32.xlu0 %v1282, 96
    %v1286 = vpop.permute.xlu0 %1285
    %v1288 = vmul.f32 %v1283, %v1286
    %1289 = vrot.lane.b32.xlu0 %v1187, 64
    %v1290 = vpop.permute.xlu0 %1289
    %v1292 = vmul.f32 %v1271, %v1290
    %v1293 = vadd.f32 %v1288, %v1292
    %1295 = vrot.lane.b32.xlu0 %v1293, 96
    %v1296 = vpop.permute.xlu0 %1295
    %v1297 = vsel %vm405, %v1296, 0
    %1299 = vmatprep.subr.mxu0 0.0
    %1300 = vmatpush1.msra.mxu0 0.0
    %1301 = vmatprep.subr.mxu0 0.0
    %1302 = vmatpush1.msra.mxu0 0.0
    %1303 = vmatprep.subr.mxu0 0.0
    %1304 = vmatpush1.msra.mxu0 0.0
    %1305 = vmatprep.subr.mxu0 0.0
    %1306 = vmatpush1.msra.mxu0 0.0
    %1307 = vmatprep.subr.mxu0 0.0
    %1308 = vmatpush1.msra.mxu0 0.0
    %1309 = vmatprep.subr.mxu0 0.0
    %1310 = vmatpush1.msra.mxu0 0.0
    %1311 = vmatprep.subr.mxu0 0.0
    %1312 = vmatpush1.msra.mxu0 0.0
    %1313 = vmatprep.subr.mxu0 0.0
    %1314 = vmatpush1.msra.mxu0 0.0
    %1315 = vmatprep.subr.mxu0 0.0
    %1316 = vmatpush1.msra.mxu0 0.0
    %1317 = vmatprep.subr.mxu0 0.0
    %1318 = vmatpush1.msra.mxu0 0.0
    %1319 = vmatprep.subr.mxu0 0.0
    %1320 = vmatpush1.msra.mxu0 0.0
    %1321 = vmatprep.subr.mxu0 0.0
    %1322 = vmatpush1.msra.mxu0 0.0
    %1323 = vmatprep.subr.mxu0 0.0
    %1324 = vmatpush1.msra.mxu0 %v41
    %1325 = vmatprep.subr.mxu0 0.0
    %1326 = vmatpush1.msra.mxu0 %v40
    %1327 = vmatprep.subr.mxu0 0.0
    %1328 = vmatpush1.msra.mxu0 %v39
    %1329 = vmatprep.subr.mxu0 0.0
    %1330 = vmatpush1.msra.mxu0 %v38
    %1331 = vmatprep.subr.mxu0 0.0
    %1332 = vmatpush2.msra.mxu0 0.0
    %1333 = vmatprep.subr.mxu0 0.0
    %1334 = vmatpush2.msra.mxu0 0.0
    %1335 = vmatprep.subr.mxu0 0.0
    %1336 = vmatpush2.msra.mxu0 0.0
    %1337 = vmatprep.subr.mxu0 0.0
    %1338 = vmatpush2.msra.mxu0 0.0
    %1339 = vmatprep.subr.mxu0 0.0
    %1340 = vmatpush2.msra.mxu0 0.0
    %1341 = vmatprep.subr.mxu0 0.0
    %1342 = vmatpush2.msra.mxu0 0.0
    %1343 = vmatprep.subr.mxu0 0.0
    %1344 = vmatpush2.msra.mxu0 0.0
    %1345 = vmatprep.subr.mxu0 0.0
    %1346 = vmatpush2.msra.mxu0 0.0
    %1347 = vmatprep.subr.mxu0 0.0
    %1348 = vmatpush2.msra.mxu0 0.0
    %1349 = vmatprep.subr.mxu0 0.0
    %1350 = vmatpush2.msra.mxu0 0.0
    %1351 = vmatprep.subr.mxu0 0.0
    %1352 = vmatpush2.msra.mxu0 0.0
    %1353 = vmatprep.subr.mxu0 0.0
    %1354 = vmatpush2.msra.mxu0 0.0
    %1355 = vmatprep.subr.mxu0 0.0
    %1356 = vmatpush2.msra.mxu0 0.0
    %1357 = vmatprep.subr.mxu0 0.0
    %1358 = vmatpush2.msra.mxu0 0.0
    %1359 = vmatprep.subr.mxu0 0.0
    %1360 = vmatpush2.msra.mxu0 0.0
    %1361 = vmatprep.subr.mxu0 0.0
    %1362 = vmatpush2.msra.mxu0 0.0
    %1363 = vmatprep.mubr.f32.mxu0 0.0
    %1364 = vmatmul.mubr.f32.gmra.mxu0 %v1297
    %v1365 = vpop.f32.mrf.mxu0
    %v1366 = vadd.f32 %v1191, %v1365
    %v1367 = vpop.f32.mrf.mxu0
    %1368 = vdwg.mxu0
    %v1369 = vadd.f32 %v392, %v1366
    %v1370 = vmul.f32 %v1369, 0.5
    %v1371 = vtanh.pop %v1370
    %v1372 = vadd.f32 %v1371, 1.0
    %v1373 = vmul.f32 %v1372, 0.5
    %1375 = vrot.lane.b32.xlu0 %v1366, 64
    %v1376 = vpop.permute.xlu0 %1375
    %v1378 = vmul.f32 %v1373, %v1376
    %1380 = vrot.lane.b32.xlu0 %v1378, 64
    %v1381 = vpop.permute.xlu0 %1380
    %v1383 = vadd.f32 %v392, %v1381
    %v1384 = vtanh.pop %v1383
    %v1385 = vsub.f32 1.0, %v1373
    %1387 = vrot.lane.b32.xlu0 %v1384, 96
    %v1388 = vpop.permute.xlu0 %1387
    %v1390 = vmul.f32 %v1385, %v1388
    %v1391 = vmul.f32 %v1373, %v1293
    %v1392 = vadd.f32 %v1390, %v1391
    %1394 = vrot.lane.b32.xlu0 %v1392, 96
    %v1395 = vpop.permute.xlu0 %1394
    %v1396 = vsel %vm405, %v1395, 0
    %1398 = vmatprep.subr.mxu0 0.0
    %1399 = vmatpush1.msra.mxu0 0.0
    %1400 = vmatprep.subr.mxu0 0.0
    %1401 = vmatpush1.msra.mxu0 0.0
    %1402 = vmatprep.subr.mxu0 0.0
    %1403 = vmatpush1.msra.mxu0 0.0
    %1404 = vmatprep.subr.mxu0 0.0
    %1405 = vmatpush1.msra.mxu0 0.0
    %1406 = vmatprep.subr.mxu0 0.0
    %1407 = vmatpush1.msra.mxu0 0.0
    %1408 = vmatprep.subr.mxu0 0.0
    %1409 = vmatpush1.msra.mxu0 0.0
    %1410 = vmatprep.subr.mxu0 0.0
    %1411 = vmatpush1.msra.mxu0 0.0
    %1412 = vmatprep.subr.mxu0 0.0
    %1413 = vmatpush1.msra.mxu0 0.0
    %1414 = vmatprep.subr.mxu0 0.0
    %1415 = vmatpush1.msra.mxu0 0.0
    %1416 = vmatprep.subr.mxu0 0.0
    %1417 = vmatpush1.msra.mxu0 0.0
    %1418 = vmatprep.subr.mxu0 0.0
    %1419 = vmatpush1.msra.mxu0 0.0
    %1420 = vmatprep.subr.mxu0 0.0
    %1421 = vmatpush1.msra.mxu0 0.0
    %1422 = vmatprep.subr.mxu0 0.0
    %1423 = vmatpush1.msra.mxu0 %v41
    %1424 = vmatprep.subr.mxu0 0.0
    %1425 = vmatpush1.msra.mxu0 %v40
    %1426 = vmatprep.subr.mxu0 0.0
    %1427 = vmatpush1.msra.mxu0 %v39
    %1428 = vmatprep.subr.mxu0 0.0
    %1429 = vmatpush1.msra.mxu0 %v38
    %1430 = vmatprep.subr.mxu0 0.0
    %1431 = vmatpush2.msra.mxu0 0.0
    %1432 = vmatprep.subr.mxu0 0.0
    %1433 = vmatpush2.msra.mxu0 0.0
    %1434 = vmatprep.subr.mxu0 0.0
    %1435 = vmatpush2.msra.mxu0 0.0
    %1436 = vmatprep.subr.mxu0 0.0
    %1437 = vmatpush2.msra.mxu0 0.0
    %1438 = vmatprep.subr.mxu0 0.0
    %1439 = vmatpush2.msra.mxu0 0.0
    %1440 = vmatprep.subr.mxu0 0.0
    %1441 = vmatpush2.msra.mxu0 0.0
    %1442 = vmatprep.subr.mxu0 0.0
    %1443 = vmatpush2.msra.mxu0 0.0
    %1444 = vmatprep.subr.mxu0 0.0
    %1445 = vmatpush2.msra.mxu0 0.0
    %1446 = vmatprep.subr.mxu0 0.0
    %1447 = vmatpush2.msra.mxu0 0.0
    %1448 = vmatprep.subr.mxu0 0.0
    %1449 = vmatpush2.msra.mxu0 0.0
    %1450 = vmatprep.subr.mxu0 0.0
    %1451 = vmatpush2.msra.mxu0 0.0
    %1452 = vmatprep.subr.mxu0 0.0
    %1453 = vmatpush2.msra.mxu0 0.0
    %1454 = vmatprep.subr.mxu0 0.0
    %1455 = vmatpush2.msra.mxu0 0.0
    %1456 = vmatprep.subr.mxu0 0.0
    %1457 = vmatpush2.msra.mxu0 0.0
    %1458 = vmatprep.subr.mxu0 0.0
    %1459 = vmatpush2.msra.mxu0 0.0
    %1460 = vmatprep.subr.mxu0 0.0
    %1461 = vmatpush2.msra.mxu0 0.0
    %1462 = vmatprep.mubr.f32.mxu0 0.0
    %1463 = vmatmul.mubr.f32.gmra.mxu0 %v1396
    %v1464 = vpop.f32.mrf.mxu0
    %v1465 = vadd.f32 %v1191, %v1464
    %v1466 = vpop.f32.mrf.mxu0
    %1467 = vdwg.mxu0
    %v1468 = vadd.f32 %v393, %v1465
    %v1469 = vmul.f32 %v1468, 0.5
    %v1470 = vtanh.pop %v1469
    %v1471 = vadd.f32 %v1470, 1.0
    %v1472 = vmul.f32 %v1471, 0.5
    %1474 = vrot.lane.b32.xlu0 %v1465, 64
    %v1475 = vpop.permute.xlu0 %1474
    %v1477 = vmul.f32 %v1472, %v1475
    %1479 = vrot.lane.b32.xlu0 %v1477, 64
    %v1480 = vpop.permute.xlu0 %1479
    %v1482 = vadd.f32 %v393, %v1480
    %v1483 = vtanh.pop %v1482
    %v1484 = vsub.f32 1.0, %v1472
    %1486 = vrot.lane.b32.xlu0 %v1483, 96
    %v1487 = vpop.permute.xlu0 %1486
    %v1489 = vmul.f32 %v1484, %v1487
    %v1490 = vmul.f32 %v1472, %v1392
    %v1491 = vadd.f32 %v1489, %v1490
    %1493 = vrot.lane.b32.xlu0 %v1491, 96
    %v1494 = vpop.permute.xlu0 %1493
    %v1495 = vsel %vm405, %v1494, 0
    %1497 = vmatprep.subr.mxu0 0.0
    %1498 = vmatpush1.msra.mxu0 0.0
    %1499 = vmatprep.subr.mxu0 0.0
    %1500 = vmatpush1.msra.mxu0 0.0
    %1501 = vmatprep.subr.mxu0 0.0
    %1502 = vmatpush1.msra.mxu0 0.0
    %1503 = vmatprep.subr.mxu0 0.0
    %1504 = vmatpush1.msra.mxu0 0.0
    %1505 = vmatprep.subr.mxu0 0.0
    %1506 = vmatpush1.msra.mxu0 0.0
    %1507 = vmatprep.subr.mxu0 0.0
    %1508 = vmatpush1.msra.mxu0 0.0
    %1509 = vmatprep.subr.mxu0 0.0
    %1510 = vmatpush1.msra.mxu0 0.0
    %1511 = vmatprep.subr.mxu0 0.0
    %1512 = vmatpush1.msra.mxu0 0.0
    %1513 = vmatprep.subr.mxu0 0.0
    %1514 = vmatpush1.msra.mxu0 0.0
    %1515 = vmatprep.subr.mxu0 0.0
    %1516 = vmatpush1.msra.mxu0 0.0
    %1517 = vmatprep.subr.mxu0 0.0
    %1518 = vmatpush1.msra.mxu0 0.0
    %1519 = vmatprep.subr.mxu0 0.0
    %1520 = vmatpush1.msra.mxu0 0.0
    %1521 = vmatprep.subr.mxu0 0.0
    %1522 = vmatpush1.msra.mxu0 %v41
    %1523 = vmatprep.subr.mxu0 0.0
    %1524 = vmatpush1.msra.mxu0 %v40
    %1525 = vmatprep.subr.mxu0 0.0
    %1526 = vmatpush1.msra.mxu0 %v39
    %1527 = vmatprep.subr.mxu0 0.0
    %1528 = vmatpush1.msra.mxu0 %v38
    %1529 = vmatprep.subr.mxu0 0.0
    %1530 = vmatpush2.msra.mxu0 0.0
    %1531 = vmatprep.subr.mxu0 0.0
    %1532 = vmatpush2.msra.mxu0 0.0
    %1533 = vmatprep.subr.mxu0 0.0
    %1534 = vmatpush2.msra.mxu0 0.0
    %1535 = vmatprep.subr.mxu0 0.0
    %1536 = vmatpush2.msra.mxu0 0.0
    %1537 = vmatprep.subr.mxu0 0.0
    %1538 = vmatpush2.msra.mxu0 0.0
    %1539 = vmatprep.subr.mxu0 0.0
    %1540 = vmatpush2.msra.mxu0 0.0
    %1541 = vmatprep.subr.mxu0 0.0
    %1542 = vmatpush2.msra.mxu0 0.0
    %1543 = vmatprep.subr.mxu0 0.0
    %1544 = vmatpush2.msra.mxu0 0.0
    %1545 = vmatprep.subr.mxu0 0.0
    %1546 = vmatpush2.msra.mxu0 0.0
    %1547 = vmatprep.subr.mxu0 0.0
    %1548 = vmatpush2.msra.mxu0 0.0
    %1549 = vmatprep.subr.mxu0 0.0
    %1550 = vmatpush2.msra.mxu0 0.0
    %1551 = vmatprep.subr.mxu0 0.0
    %1552 = vmatpush2.msra.mxu0 0.0
    %1553 = vmatprep.subr.mxu0 0.0
    %1554 = vmatpush2.msra.mxu0 0.0
    %1555 = vmatprep.subr.mxu0 0.0
    %1556 = vmatpush2.msra.mxu0 0.0
    %1557 = vmatprep.subr.mxu0 0.0
    %1558 = vmatpush2.msra.mxu0 0.0
    %1559 = vmatprep.subr.mxu0 0.0
    %1560 = vmatpush2.msra.mxu0 0.0
    %1561 = vmatprep.mubr.f32.mxu0 0.0
    %1562 = vmatmul.mubr.f32.gmra.mxu0 %v1495
    %v1563 = vpop.f32.mrf.mxu0
    %v1564 = vadd.f32 %v1191, %v1563
    %v1565 = vpop.f32.mrf.mxu0
    %1566 = vdwg.mxu0
    %v1567 = vadd.f32 %v394, %v1564
    %v1568 = vmul.f32 %v1567, 0.5
    %v1569 = vtanh.pop %v1568
    %v1570 = vadd.f32 %v1569, 1.0
    %v1571 = vmul.f32 %v1570, 0.5
    %1573 = vrot.lane.b32.xlu0 %v1564, 64
    %v1574 = vpop.permute.xlu0 %1573
    %v1576 = vmul.f32 %v1571, %v1574
    %1578 = vrot.lane.b32.xlu0 %v1576, 64
    %v1579 = vpop.permute.xlu0 %1578
    %v1581 = vadd.f32 %v394, %v1579
    %v1582 = vtanh.pop %v1581
    %v1583 = vsub.f32 1.0, %v1571
    %1585 = vrot.lane.b32.xlu0 %v1582, 96
    %v1586 = vpop.permute.xlu0 %1585
    %v1588 = vmul.f32 %v1583, %v1586
    %v1589 = vmul.f32 %v1571, %v1491
    %v1590 = vadd.f32 %v1588, %v1589
    %v1591 = vlaneseq
    %v1592 = vshrl.u32 %v1591, 7
    %v1593 = vsub.s32 0, %v1592
    %v1594 = vrot.slane %v48, %v1593
    %1596 = vrot.lane.b32.xlu0 %v1590, 96
    %v1597 = vpop.permute.xlu0 %1596
    %v1598 = vsel %vm405, %v1597, 0
    %1600 = vmatprep.subr.mxu0 0.0
    %1601 = vmatpush1.msra.mxu0 0.0
    %1602 = vmatprep.subr.mxu0 0.0
    %1603 = vmatpush1.msra.mxu0 0.0
    %1604 = vmatprep.subr.mxu0 0.0
    %1605 = vmatpush1.msra.mxu0 0.0
    %1606 = vmatprep.subr.mxu0 0.0
    %1607 = vmatpush1.msra.mxu0 0.0
    %1608 = vmatprep.subr.mxu0 0.0
    %1609 = vmatpush1.msra.mxu0 0.0
    %1610 = vmatprep.subr.mxu0 0.0
    %1611 = vmatpush1.msra.mxu0 0.0
    %1612 = vmatprep.subr.mxu0 0.0
    %1613 = vmatpush1.msra.mxu0 0.0
    %1614 = vmatprep.subr.mxu0 0.0
    %1615 = vmatpush1.msra.mxu0 0.0
    %1616 = vmatprep.subr.mxu0 0.0
    %1617 = vmatpush1.msra.mxu0 0.0
    %1618 = vmatprep.subr.mxu0 0.0
    %1619 = vmatpush1.msra.mxu0 0.0
    %1620 = vmatprep.subr.mxu0 0.0
    %1621 = vmatpush1.msra.mxu0 0.0
    %1622 = vmatprep.subr.mxu0 0.0
    %1623 = vmatpush1.msra.mxu0 0.0
    %1624 = vmatprep.subr.mxu0 0.0
    %1625 = vmatpush1.msra.mxu0 %v47
    %1626 = vmatprep.subr.mxu0 0.0
    %1627 = vmatpush1.msra.mxu0 %v46
    %1628 = vmatprep.subr.mxu0 0.0
    %1629 = vmatpush1.msra.mxu0 %v45
    %1630 = vmatprep.subr.mxu0 0.0
    %1631 = vmatpush1.msra.mxu0 %v44
    %1632 = vmatprep.subr.mxu0 0.0
    %1633 = vmatpush2.msra.mxu0 0.0
    %1634 = vmatprep.subr.mxu0 0.0
    %1635 = vmatpush2.msra.mxu0 0.0
    %1636 = vmatprep.subr.mxu0 0.0
    %1637 = vmatpush2.msra.mxu0 0.0
    %1638 = vmatprep.subr.mxu0 0.0
    %1639 = vmatpush2.msra.mxu0 0.0
    %1640 = vmatprep.subr.mxu0 0.0
    %1641 = vmatpush2.msra.mxu0 0.0
    %1642 = vmatprep.subr.mxu0 0.0
    %1643 = vmatpush2.msra.mxu0 0.0
    %1644 = vmatprep.subr.mxu0 0.0
    %1645 = vmatpush2.msra.mxu0 0.0
    %1646 = vmatprep.subr.mxu0 0.0
    %1647 = vmatpush2.msra.mxu0 0.0
    %1648 = vmatprep.subr.mxu0 0.0
    %1649 = vmatpush2.msra.mxu0 0.0
    %1650 = vmatprep.subr.mxu0 0.0
    %1651 = vmatpush2.msra.mxu0 0.0
    %1652 = vmatprep.subr.mxu0 0.0
    %1653 = vmatpush2.msra.mxu0 0.0
    %1654 = vmatprep.subr.mxu0 0.0
    %1655 = vmatpush2.msra.mxu0 0.0
    %1656 = vmatprep.subr.mxu0 0.0
    %1657 = vmatpush2.msra.mxu0 0.0
    %1658 = vmatprep.subr.mxu0 0.0
    %1659 = vmatpush2.msra.mxu0 0.0
    %1660 = vmatprep.subr.mxu0 0.0
    %1661 = vmatpush2.msra.mxu0 0.0
    %1662 = vmatprep.subr.mxu0 0.0
    %1663 = vmatpush2.msra.mxu0 0.0
    %1664 = vmatprep.mubr.f32.mxu0 0.0
    %1665 = vmatmul.mubr.f32.gmra.mxu0 %v1297
    %v1666 = vpop.f32.mrf.mxu0
    %v1667 = vadd.f32 %v1594, %v1666
    %v1668 = vpop.f32.mrf.mxu0
    %1669 = vmatprep.mubr.f32.mxu0 0.0
    %1670 = vmatmul.mubr.f32.gmra.mxu0 %v1396
    %v1671 = vpop.f32.mrf.mxu0
    %v1672 = vadd.f32 %v1594, %v1671
    %v1673 = vpop.f32.mrf.mxu0
    %1674 = vmatprep.mubr.f32.mxu0 0.0
    %1675 = vmatmul.mubr.f32.gmra.mxu0 %v1495
    %v1676 = vpop.f32.mrf.mxu0
    %v1677 = vadd.f32 %v1594, %v1676
    %v1678 = vpop.f32.mrf.mxu0
    %1679 = vmatprep.mubr.f32.mxu0 0.0
    %1680 = vmatmul.mubr.f32.gmra.mxu0 %v1598
    %v1681 = vpop.f32.mrf.mxu0
    %v1682 = vadd.f32 %v1594, %v1681
    %v1683 = vpop.f32.mrf.mxu0
    %1684 = vdwg.mxu0
    %v1685 = vmax.f32 %v1667, 0.0
    %v1686 = vmax.f32 %v1672, 0.0
    %v1687 = vmax.f32 %v1677, 0.0
    %v1688 = vmax.f32 %v1682, 0.0
    %v1689 = vlaneseq
    %v1690 = vshrl.u32 %v1689, 7
    %v1691 = vsub.s32 0, %v1690
    %v1692 = vrot.slane %v53, %v1691
    %v1694 = vsel %vm405, %v1685, 0
    %v1697 = vsel %vm405, %v1686, 0
    %v1700 = vsel %vm405, %v1687, 0
    %v1703 = vsel %vm405, %v1688, 0
    %1705 = vmatprep.subr.mxu0 0.0
    %1706 = vmatpush1.msra.mxu0 0.0
    %1707 = vmatprep.subr.mxu0 0.0
    %1708 = vmatpush1.msra.mxu0 0.0
    %1709 = vmatprep.subr.mxu0 0.0
    %1710 = vmatpush1.msra.mxu0 0.0
    %1711 = vmatprep.subr.mxu0 0.0
    %1712 = vmatpush1.msra.mxu0 0.0
    %1713 = vmatprep.subr.mxu0 0.0
    %1714 = vmatpush1.msra.mxu0 0.0
    %1715 = vmatprep.subr.mxu0 0.0
    %1716 = vmatpush1.msra.mxu0 0.0
    %1717 = vmatprep.subr.mxu0 0.0
    %1718 = vmatpush1.msra.mxu0 0.0
    %1719 = vmatprep.subr.mxu0 0.0
    %1720 = vmatpush1.msra.mxu0 0.0
    %1721 = vmatprep.subr.mxu0 0.0
    %1722 = vmatpush1.msra.mxu0 0.0
    %1723 = vmatprep.subr.mxu0 0.0
    %1724 = vmatpush1.msra.mxu0 0.0
    %1725 = vmatprep.subr.mxu0 0.0
    %1726 = vmatpush1.msra.mxu0 0.0
    %1727 = vmatprep.subr.mxu0 0.0
    %1728 = vmatpush1.msra.mxu0 0.0
    %1729 = vmatprep.subr.mxu0 0.0
    %1730 = vmatpush1.msra.mxu0 %v52
    %1731 = vmatprep.subr.mxu0 0.0
    %1732 = vmatpush1.msra.mxu0 %v51
    %1733 = vmatprep.subr.mxu0 0.0
    %1734 = vmatpush1.msra.mxu0 %v50
    %1735 = vmatprep.subr.mxu0 0.0
    %1736 = vmatpush1.msra.mxu0 %v49
    %1737 = vmatprep.subr.mxu0 0.0
    %1738 = vmatpush2.msra.mxu0 0.0
    %1739 = vmatprep.subr.mxu0 0.0
    %1740 = vmatpush2.msra.mxu0 0.0
    %1741 = vmatprep.subr.mxu0 0.0
    %1742 = vmatpush2.msra.mxu0 0.0
    %1743 = vmatprep.subr.mxu0 0.0
    %1744 = vmatpush2.msra.mxu0 0.0
    %1745 = vmatprep.subr.mxu0 0.0
    %1746 = vmatpush2.msra.mxu0 0.0
    %1747 = vmatprep.subr.mxu0 0.0
    %1748 = vmatpush2.msra.mxu0 0.0
    %1749 = vmatprep.subr.mxu0 0.0
    %1750 = vmatpush2.msra.mxu0 0.0
    %1751 = vmatprep.subr.mxu0 0.0
    %1752 = vmatpush2.msra.mxu0 0.0
    %1753 = vmatprep.subr.mxu0 0.0
    %1754 = vmatpush2.msra.mxu0 0.0
    %1755 = vmatprep.subr.mxu0 0.0
    %1756 = vmatpush2.msra.mxu0 0.0
    %1757 = vmatprep.subr.mxu0 0.0
    %1758 = vmatpush2.msra.mxu0 0.0
    %1759 = vmatprep.subr.mxu0 0.0
    %1760 = vmatpush2.msra.mxu0 0.0
    %1761 = vmatprep.subr.mxu0 0.0
    %1762 = vmatpush2.msra.mxu0 0.0
    %1763 = vmatprep.subr.mxu0 0.0
    %1764 = vmatpush2.msra.mxu0 0.0
    %1765 = vmatprep.subr.mxu0 0.0
    %1766 = vmatpush2.msra.mxu0 0.0
    %1767 = vmatprep.subr.mxu0 0.0
    %1768 = vmatpush2.msra.mxu0 0.0
    %1769 = vmatprep.mubr.f32.mxu0 0.0
    %1770 = vmatmul.mubr.f32.gmra.mxu0 %v1694
    %v1771 = vpop.f32.mrf.mxu0
    %v1772 = vadd.f32 %v1692, %v1771
    %v1773 = vpop.f32.mrf.mxu0
    %1774 = vmatprep.mubr.f32.mxu0 0.0
    %1775 = vmatmul.mubr.f32.gmra.mxu0 %v1697
    %v1776 = vpop.f32.mrf.mxu0
    %v1777 = vadd.f32 %v1692, %v1776
    %v1778 = vpop.f32.mrf.mxu0
    %1779 = vmatprep.mubr.f32.mxu0 0.0
    %1780 = vmatmul.mubr.f32.gmra.mxu0 %v1700
    %v1781 = vpop.f32.mrf.mxu0
    %v1782 = vadd.f32 %v1692, %v1781
    %v1783 = vpop.f32.mrf.mxu0
    %1784 = vmatprep.mubr.f32.mxu0 0.0
    %1785 = vmatmul.mubr.f32.gmra.mxu0 %v1703
    %v1786 = vpop.f32.mrf.mxu0
    %v1787 = vadd.f32 %v1692, %v1786
    %v1788 = vpop.f32.mrf.mxu0
    %1789 = vdwg.mxu0
    %v1790 = vmax.f32 %v1772, 0.0
    %v1791 = vmax.f32 %v1777, 0.0
    %v1792 = vmax.f32 %v1782, 0.0
    %v1793 = vmax.f32 %v1787, 0.0
    %v1794 = vand.u32 2147483647, %v1772
    %v1795 = vand.u32 2147483647, %v1777
    %v1796 = vand.u32 2147483647, %v1782
    %v1797 = vand.u32 2147483647, %v1787
    %v1798 = vsub.f32 0.0, %v1794
    %v1799 = vsub.f32 0.0, %v1795
    %v1800 = vsub.f32 0.0, %v1796
    %v1801 = vsub.f32 0.0, %v1797
    %v1802 = vmul.f32 %v1798, 1.442695
    %v1803 = vpow.pop %v1802
    %v1804 = vmul.f32 %v1799, 1.442695
    %v1805 = vpow.pop %v1804
    %v1806 = vmul.f32 %v1800, 1.442695
    %v1807 = vpow.pop %v1806
    %v1808 = vmul.f32 %v1801, 1.442695
    %v1809 = vpow.pop %v1808
    %v1810 = vadd.f32 %v1803, 1.0
    %v1811 = vlog2.pop %v1810
    %v1812 = vmul.f32 %v1811, 0.6931472
    %v1813 = vmul.f32 -0.5, %v1803
    %v1814 = vadd.f32 %v1813, 1.0
    %v1815 = vmul.f32 %v1814, %v1803
    %v1816 = vand.u32 2147483647, %v1803
    %vm1817 = vcmp.lt.f32.partialorder %v1816, 0.0004427343
    %v1818 = vsel %vm1817, %v1815, %v1812
    %v1819 = vadd.f32 %v1805, 1.0
    %v1820 = vlog2.pop %v1819
    %v1821 = vmul.f32 %v1820, 0.6931472
    %v1822 = vmul.f32 -0.5, %v1805
    %v1823 = vadd.f32 %v1822, 1.0
    %v1824 = vmul.f32 %v1823, %v1805
    %v1825 = vand.u32 2147483647, %v1805
    %vm1826 = vcmp.lt.f32.partialorder %v1825, 0.0004427343
    %v1827 = vsel %vm1826, %v1824, %v1821
    %v1828 = vadd.f32 %v1807, 1.0
    %v1829 = vlog2.pop %v1828
    %v1830 = vmul.f32 %v1829, 0.6931472
    %v1831 = vmul.f32 -0.5, %v1807
    %v1832 = vadd.f32 %v1831, 1.0
    %v1833 = vmul.f32 %v1832, %v1807
    %v1834 = vand.u32 2147483647, %v1807
    %vm1835 = vcmp.lt.f32.partialorder %v1834, 0.0004427343
    %v1836 = vsel %vm1835, %v1833, %v1830
    %v1837 = vadd.f32 %v1809, 1.0
    %v1838 = vlog2.pop %v1837
    %v1839 = vmul.f32 %v1838, 0.6931472
    %v1840 = vmul.f32 -0.5, %v1809
    %v1841 = vadd.f32 %v1840, 1.0
    %v1842 = vmul.f32 %v1841, %v1809
    %v1843 = vand.u32 2147483647, %v1809
    %vm1844 = vcmp.lt.f32.partialorder %v1843, 0.0004427343
    %v1845 = vsel %vm1844, %v1842, %v1839
    %v1846 = vadd.f32 %v1790, %v1818
    %v1847 = vadd.f32 %v1791, %v1827
    %v1848 = vadd.f32 %v1792, %v1836
    %v1849 = vadd.f32 %v1793, %v1845
    %v1850 = vadd.f32 %v1846, 0.001
    %v1851 = vadd.f32 %v1847, 0.001
    %v1852 = vadd.f32 %v1848, 0.001
    %v1853 = vadd.f32 %v1849, 0.001
    %v1854 = vsub.f32 %v395, %v1772
    %v1855 = vsub.f32 %v396, %v1777
    %v1856 = vsub.f32 %v397, %v1782
    %v1857 = vsub.f32 %v398, %v1787
    %1862 = vrot.lane.b32.xlu0 %v1850, 126
    %v1863 = vpop.permute.xlu0 %1862
    %1864 = vrot.lane.b32.xlu0 %v1851, 126
    %v1865 = vpop.permute.xlu0 %1864
    %1866 = vrot.lane.b32.xlu0 %v1852, 126
    %v1867 = vpop.permute.xlu0 %1866
    %1868 = vrot.lane.b32.xlu0 %v1853, 126
    %v1869 = vpop.permute.xlu0 %1868
    %v1874 = vrcp.pop %v1863
    %v1875 = vmul.f32 %v1854, %v1874
    %v1876 = vrcp.pop %v1865
    %v1877 = vmul.f32 %v1855, %v1876
    %v1878 = vrcp.pop %v1867
    %v1879 = vmul.f32 %v1856, %v1878
    %v1880 = vrcp.pop %v1869
    %v1881 = vmul.f32 %v1857, %v1880
    %v1882 = vmul.f32 %v1875, %v1875
    %v1883 = vmul.f32 %v1877, %v1877
    %v1884 = vmul.f32 %v1879, %v1879
    %v1885 = vmul.f32 %v1881, %v1881
    %v1886 = vlog2.pop %v1850
    %v1887 = vmul.f32 %v1886, 0.6931472
    %v1888 = vlog2.pop %v1851
    %v1889 = vmul.f32 %v1888, 0.6931472
    %v1890 = vlog2.pop %v1852
    %v1891 = vmul.f32 %v1890, 0.6931472
    %v1892 = vlog2.pop %v1853
    %v1893 = vmul.f32 %v1892, 0.6931472
    %v1894 = vadd.f32 %v1882, 0.0
    %v1895 = vadd.f32 %v1887, 0.0
    %v1896 = vadd.f32 %v1894, %v1883
    %v1897 = vadd.f32 %v1895, %v1889
    %v1898 = vadd.f32 %v1896, %v1884
    %v1899 = vadd.f32 %v1897, %v1891
    %v1900 = vadd.f32 %v1898, %v1885
    %v1901 = vadd.f32 %v1899, %v1893
    %1903 = vrot.lane.b32.xlu0 %v1900, 127
    %v1904 = vpop.permute.xlu0 %1903
    %v1906 = vadd.f32 %v1900, %v1904
    %v1907 = vmul.f32 %v1906, -0.5
    %v1908 = vsub.f32 %v1907, 7.351508
    %1910 = vrot.lane.b32.xlu0 %v1901, 127
    %v1911 = vpop.permute.xlu0 %1910
    %v1913 = vadd.f32 %v1901, %v1911
    %v1914 = vsub.f32 0.0, %v1913
    %vm1915 = vcmp.eq.s32.totalorder %v400, 0
    %1917 = vset.pattern.permute.xlu0 0
    %1918 = vperm.xlu0 %1917, %v1908
    %v1919 = vpop.permute.xlu0 %1918
    %1922 = vset.pattern.permute.xlu0 2
    %1923 = vperm.xlu0 %1922, %v1914
    %v1924 = vpop.permute.xlu0 %1923
    %v1926 = vsel %vm1915, %v1919, %v1924
    %vm1927 = vcmask 15360
    %1928 = vst.msk [vmem:[%s3] sm:$0xff] %vm1927, %v1926
    // Predicated region
    $region18: #{tpu_custom_call.1} parent=1 // pred_check
      _
    $region19: #{tpu_custom_call.1} parent=1 // pred_check_branch
      %1930 = sbr.rel (0) target = $region21
    $region20: #{tpu_custom_call.1} parent=1 // pred_region
      _
    $region21: #{tpu_custom_call.1} parent=1 // pred_fallthru
      _
    // Predicated region
    $region22: #{tpu_custom_call.1} parent=1 // pred_check
      _
    $region23: #{tpu_custom_call.1} parent=1 // pred_check_branch
      %1932 = sbr.rel (0) target = $region25
    $region24: #{tpu_custom_call.1} parent=1 // pred_region
      _
    $region25: #{tpu_custom_call.1} parent=1 // pred_fallthru
      _
    %1933 = vsyncpa [#allocation3], 1

</llo_original>
